<compile_context>
chip_gen: v5e
topology: v5e:2x2
jax: 0.10.0
libtpu: 0.0.40
codegen_flags: <defaults>
</compile_context>

<pallas_src>
import jax
import jax.numpy as jnp
from jax.experimental import pallas as pl
from jax.experimental.pallas import tpu as pltpu

# Module defaults from __init__
D_MODEL = 128
NHEAD = 4
HEAD_DIM = D_MODEL // NHEAD
DIM_FF = 256
NUM_LAYERS = 6
LN_EPS = 1e-5  # nn.LayerNorm default


def _layernorm(x, g, b):
    mu = jnp.mean(x, axis=-1, keepdims=True)
    xc = x - mu
    var = jnp.mean(xc * xc, axis=-1, keepdims=True)
    return xc * jax.lax.rsqrt(var + LN_EPS) * g + b


# ---------------------------------------------------------------------------
# Fused kernel: embedding -> NUM_LAYERS encoder layers -> output projection
# ---------------------------------------------------------------------------
def _fused_encoder_kernel(x_ref, emb_w_ref, emb_b_ref,
                          wqkv_ref, bqkv_ref, wo_ref, bo_ref,
                          g1_ref, be1_ref, w1_ref, b1_ref,
                          w2_ref, b2_ref, g2_ref, be2_ref,
                          out_w_ref, out_b_ref, o_ref):
    Bt, S, Din = x_ref.shape
    BtS = Bt * S
    OP = out_w_ref.shape[1]

    # ----- embedding linear (fused prologue) -----
    x_in = x_ref[...].reshape(BtS, Din).astype(jnp.bfloat16)
    x2d = (jnp.dot(x_in, emb_w_ref[...], preferred_element_type=jnp.float32)
           + emb_b_ref[...])                                          # (BtS, D) f32

    # ----- causal mask built in-kernel (no HBM staging) -----
    row = jax.lax.broadcasted_iota(jnp.int32, (S, S), 0)
    col = jax.lax.broadcasted_iota(jnp.int32, (S, S), 1)
    mask = jnp.where(col <= row, 0.0, -jnp.inf).astype(jnp.float32)   # (S, S)

    scale = 1.0 / (HEAD_DIM ** 0.5)

    # ----- encoder layers: weights stacked on a leading (L,) axis -----
    def layer_body(l, x2d):
        xb = x2d.astype(jnp.bfloat16)
        qkv = (jnp.dot(xb, wqkv_ref[l], preferred_element_type=jnp.float32)
               + bqkv_ref[l])                                         # (BtS, 3D)
        q3 = qkv[:, :D_MODEL].reshape(Bt, S, D_MODEL)
        k3 = qkv[:, D_MODEL:2 * D_MODEL].reshape(Bt, S, D_MODEL)
        v3 = qkv[:, 2 * D_MODEL:].reshape(Bt, S, D_MODEL)
        wo_l = wo_ref[l]                                              # (D, D) bf16

        attn2d = jnp.zeros((BtS, D_MODEL), jnp.float32)
        for h in range(NHEAD):              # static unroll; Wo folded per head
            lo, hi = h * HEAD_DIM, (h + 1) * HEAD_DIM
            qh = q3[:, :, lo:hi].astype(jnp.bfloat16)
            kh = k3[:, :, lo:hi].astype(jnp.bfloat16)
            vh = v3[:, :, lo:hi].astype(jnp.bfloat16)
            s = (jnp.einsum('bqd,bkd->bqk', qh, kh,
                            preferred_element_type=jnp.float32) * scale + mask)
            m = jnp.max(s, axis=-1, keepdims=True)
            e = jnp.exp(s - m)
            p = e * pl.reciprocal(jnp.sum(e, axis=-1, keepdims=True), approx=True)
            ctx = jnp.einsum('bqk,bkd->bqd', p.astype(jnp.bfloat16), vh,
                             preferred_element_type=jnp.float32)      # (Bt,S,hd)
            ctx2d = ctx.reshape(BtS, HEAD_DIM).astype(jnp.bfloat16)
            attn2d = attn2d + jnp.dot(ctx2d, wo_l[lo:hi, :],
                                      preferred_element_type=jnp.float32)
        attn2d = attn2d + bo_ref[l]

        # post-norm (PyTorch TransformerEncoderLayer default, norm_first=False)
        x1 = _layernorm(x2d + attn2d, g1_ref[l], be1_ref[l])
        h1 = jnp.maximum(
            jnp.dot(x1.astype(jnp.bfloat16), w1_ref[l],
                    preferred_element_type=jnp.float32) + b1_ref[l], 0.0)  # ReLU
        ff = (jnp.dot(h1.astype(jnp.bfloat16), w2_ref[l],
                      preferred_element_type=jnp.float32) + b2_ref[l])
        return _layernorm(x1 + ff, g2_ref[l], be2_ref[l])

    x2d = jax.lax.fori_loop(0, NUM_LAYERS, layer_body, x2d)

    # ----- output linear (lane-dense, padded to OP lanes) -----
    out2d = (jnp.dot(x2d.astype(jnp.bfloat16), out_w_ref[...],
                     preferred_element_type=jnp.float32) + out_b_ref[...])
    o_ref[...] = out2d.reshape(Bt, S, OP)


_WEIGHT_ORDER = ('emb_w', 'emb_b', 'wqkv', 'bqkv', 'wo', 'bo',
                 'g1', 'be1', 'w1', 'b1', 'w2', 'b2', 'g2', 'be2',
                 'out_w', 'out_b')


def _full_spec(a):
    n = a.ndim
    return pl.BlockSpec(a.shape, lambda b, _n=n: (0,) * _n)


def _pick_batch_tile(B, S, target_rows=512):
    """Largest divisor of B such that Bt*S stays near the target row count."""
    cap = max(1, target_rows // max(S, 1))
    bt = 1
    for d in range(1, B + 1):
        if B % d == 0 and d <= cap:
            bt = d
    return bt


def _fused_forward_call(fused, xx, Bt):
    B, S, Din = xx.shape
    OP = fused['out_w'].shape[1]
    weights = [fused[k] for k in _WEIGHT_ORDER]
    in_specs = ([pl.BlockSpec((Bt, S, Din), lambda b: (b, 0, 0))]
                + [_full_spec(w) for w in weights])
    return pl.pallas_call(
        _fused_encoder_kernel,
        grid=(B // Bt,),
        out_shape=jax.ShapeDtypeStruct((B, S, OP), jnp.float32),
        in_specs=in_specs,
        out_specs=pl.BlockSpec((Bt, S, OP), lambda b: (b, 0, 0)),
        compiler_params=pltpu.CompilerParams(dimension_semantics=("parallel",)),
    )(xx, *weights)


# ---------------------------------------------------------------------------
# Parameter setup / model glue (plain JAX)
# ---------------------------------------------------------------------------
def causal_mask(S):
    i = jnp.arange(S)[:, None]
    j = jnp.arange(S)[None, :]
    return jnp.where(j <= i, 0.0, -jnp.inf).astype(jnp.float32)


def init_params(key, input_dim, output_dim):
    keys = jax.random.split(key, 4 + NUM_LAYERS)

    def w(k, shape, scale=0.05):
        return (scale * jax.random.normal(k, shape)).astype(jnp.float32)

    params = {
        'emb_w': w(keys[0], (input_dim, D_MODEL)),
        'emb_b': w(keys[1], (1, D_MODEL)),
        'out_w': w(keys[2], (D_MODEL, output_dim)),
        'out_b': w(keys[3], (1, output_dim)),
        'layers': [],
    }
    for l in range(NUM_LAYERS):
        lk = jax.random.split(keys[4 + l], 8)
        params['layers'].append({
            'wqkv': w(lk[0], (D_MODEL, 3 * D_MODEL)),
            'bqkv': w(lk[1], (1, 3 * D_MODEL)),
            'wo':   w(lk[2], (D_MODEL, D_MODEL)),
            'bo':   w(lk[3], (1, D_MODEL)),
            'g1':   jnp.ones((1, D_MODEL), jnp.float32),
            'be1':  jnp.zeros((1, D_MODEL), jnp.float32),
            'w1':   w(lk[4], (D_MODEL, DIM_FF)),
            'b1':   w(lk[5], (1, DIM_FF)),
            'w2':   w(lk[6], (DIM_FF, D_MODEL)),
            'b2':   w(lk[7], (1, D_MODEL)),
            'g2':   jnp.ones((1, D_MODEL), jnp.float32),
            'be2':  jnp.zeros((1, D_MODEL), jnp.float32),
        })
    return params


def prepare_fused_params(params):
    """Stack per-layer weights, cast matmul weights to bf16, pad output lanes."""
    def stack(key, dtype=None):
        a = jnp.stack([lp[key] for lp in params['layers']])
        return a.astype(dtype) if dtype is not None else a

    out_dim = params['out_w'].shape[1]
    OP = max(128, ((out_dim + 127) // 128) * 128)
    out_w = jnp.zeros((D_MODEL, OP), jnp.float32).at[:, :out_dim].set(params['out_w'])
    out_b = jnp.zeros((1, OP), jnp.float32).at[:, :out_dim].set(params['out_b'])

    fused = {
        'emb_w': params['emb_w'].astype(jnp.bfloat16),
        'emb_b': params['emb_b'],
        'wqkv': stack('wqkv', jnp.bfloat16), 'bqkv': stack('bqkv'),
        'wo':   stack('wo',   jnp.bfloat16), 'bo':   stack('bo'),
        'g1':   stack('g1'),                 'be1':  stack('be1'),
        'w1':   stack('w1',   jnp.bfloat16), 'b1':   stack('b1'),
        'w2':   stack('w2',   jnp.bfloat16), 'b2':   stack('b2'),
        'g2':   stack('g2'),                 'be2':  stack('be2'),
        'out_w': out_w.astype(jnp.bfloat16), 'out_b': out_b,
    }
    return fused, out_dim


def transformer_encoder_only_forward(params, xx, output_length):
    """xx: (B, S, input_dim) float32. Returns (B, output_length, output_dim)."""
    B, S, _ = xx.shape
    fused, out_dim = prepare_fused_params(params)
    Bt = _pick_batch_tile(B, S)
    out = _fused_forward_call(fused, xx, Bt)[..., :out_dim]
    if output_length == S:
        return out
    # The PyTorch autoregressive branch never re-runs the encoder, so every
    # step emits the same last-position output -> just repeat it.
    last = out[:, -1:, :]
    return jnp.tile(last, (1, output_length, 1))


# Pure-JAX reference (same math, f32 activations). Matmul weights are rounded
# through bf16 to mirror the kernel's storage dtype, so the comparison checks
# kernel wiring rather than quantization noise.
def reference_forward(params, xx, output_length):
    def r(w):
        return w.astype(jnp.bfloat16).astype(jnp.float32)

    B, S, _ = xx.shape
    x = (xx.reshape(B * S, -1) @ r(params['emb_w']) + params['emb_b']).reshape(B, S, D_MODEL)
    mask = causal_mask(S)
    for lp in params['layers']:
        qkv = x @ r(lp['wqkv']) + lp['bqkv']
        q = qkv[..., :D_MODEL].reshape(B, S, NHEAD, HEAD_DIM).transpose(0, 2, 1, 3)
        k = qkv[..., D_MODEL:2 * D_MODEL].reshape(B, S, NHEAD, HEAD_DIM).transpose(0, 2, 1, 3)
        v = qkv[..., 2 * D_MODEL:].reshape(B, S, NHEAD, HEAD_DIM).transpose(0, 2, 1, 3)
        s = jnp.einsum('bhqd,bhkd->bhqk', q, k) / (HEAD_DIM ** 0.5) + mask
        p = jax.nn.softmax(s, axis=-1)
        a = jnp.einsum('bhqk,bhkd->bhqd', p, v).transpose(0, 2, 1, 3).reshape(B, S, D_MODEL)
        a = a @ r(lp['wo']) + lp['bo']
        x = _layernorm(x + a, lp['g1'], lp['be1'])
        h = jax.nn.relu(x @ r(lp['w1']) + lp['b1'])
        f = h @ r(lp['w2']) + lp['b2']
        x = _layernorm(x + f, lp['g2'], lp['be2'])
    out = (x.reshape(B * S, D_MODEL) @ r(params['out_w']) + params['out_b']).reshape(B, S, -1)
    if output_length == S:
        return out
    return jnp.tile(out[:, -1:, :], (1, output_length, 1))


if __name__ == "__main__":
    B, S, input_dim, output_dim = 2, 8, 16, 16
    params = init_params(jax.random.PRNGKey(0), input_dim, output_dim)
    xx = jax.random.normal(jax.random.PRNGKey(1), (B, S, input_dim), jnp.float32)

    out = transformer_encoder_only_forward(params, xx, output_length=S)
    out = jax.block_until_ready(out)

    ref = reference_forward(params, xx, S)
    assert out.shape == (B, S, output_dim), out.shape
    assert bool(jnp.all(jnp.isfinite(out)))
    assert bool(jnp.allclose(out, ref, rtol=4e-2, atol=4e-2)), \
        float(jnp.max(jnp.abs(out - ref)))
    print("KERNEL_OK")
</pallas_src>

<mosaic_0001>
module attributes {stable_mosaic.version = 11 : i64} {
  func.func @_fused_encoder_kernel(%arg0: i32, %arg1: memref<2x8x16xf32, #tpu.memory_space<vmem>>, %arg2: memref<16x128xbf16, #tpu.memory_space<vmem>>, %arg3: memref<1x128xf32, #tpu.memory_space<vmem>>, %arg4: memref<6x128x384xbf16, #tpu.memory_space<vmem>>, %arg5: memref<6x1x384xf32, #tpu.memory_space<vmem>>, %arg6: memref<6x128x128xbf16, #tpu.memory_space<vmem>>, %arg7: memref<6x1x128xf32, #tpu.memory_space<vmem>>, %arg8: memref<6x1x128xf32, #tpu.memory_space<vmem>>, %arg9: memref<6x1x128xf32, #tpu.memory_space<vmem>>, %arg10: memref<6x128x256xbf16, #tpu.memory_space<vmem>>, %arg11: memref<6x1x256xf32, #tpu.memory_space<vmem>>, %arg12: memref<6x256x128xbf16, #tpu.memory_space<vmem>>, %arg13: memref<6x1x128xf32, #tpu.memory_space<vmem>>, %arg14: memref<6x1x128xf32, #tpu.memory_space<vmem>>, %arg15: memref<6x1x128xf32, #tpu.memory_space<vmem>>, %arg16: memref<128x128xbf16, #tpu.memory_space<vmem>>, %arg17: memref<1x128xf32, #tpu.memory_space<vmem>>, %arg18: memref<2x8x128xf32, #tpu.memory_space<vmem>>) attributes {dimension_semantics = [#tpu.dimension_semantics<parallel>], iteration_bounds = array<i64: 1>, scalar_prefetch = 0 : i64, scratch_operands = 0 : i64, tpu.core_type = #tpu.core_type<tc>, window_params = [{transform_indices = @transform_0, window_bounds = array<i64: 2, 8, 16>}, {pipeline_mode = #tpu.pipeline_mode<synchronous>, transform_indices = @transform_1, window_bounds = array<i64: 16, 128>}, {pipeline_mode = #tpu.pipeline_mode<synchronous>, transform_indices = @transform_2, window_bounds = array<i64: 1, 128>}, {pipeline_mode = #tpu.pipeline_mode<synchronous>, transform_indices = @transform_3, window_bounds = array<i64: 6, 128, 384>}, {pipeline_mode = #tpu.pipeline_mode<synchronous>, transform_indices = @transform_4, window_bounds = array<i64: 6, 1, 384>}, {pipeline_mode = #tpu.pipeline_mode<synchronous>, transform_indices = @transform_5, window_bounds = array<i64: 6, 128, 128>}, {pipeline_mode = #tpu.pipeline_mode<synchronous>, transform_indices = @transform_6, window_bounds = array<i64: 6, 1, 128>}, {pipeline_mode = #tpu.pipeline_mode<synchronous>, transform_indices = @transform_7, window_bounds = array<i64: 6, 1, 128>}, {pipeline_mode = #tpu.pipeline_mode<synchronous>, transform_indices = @transform_8, window_bounds = array<i64: 6, 1, 128>}, {pipeline_mode = #tpu.pipeline_mode<synchronous>, transform_indices = @transform_9, window_bounds = array<i64: 6, 128, 256>}, {pipeline_mode = #tpu.pipeline_mode<synchronous>, transform_indices = @transform_10, window_bounds = array<i64: 6, 1, 256>}, {pipeline_mode = #tpu.pipeline_mode<synchronous>, transform_indices = @transform_11, window_bounds = array<i64: 6, 256, 128>}, {pipeline_mode = #tpu.pipeline_mode<synchronous>, transform_indices = @transform_12, window_bounds = array<i64: 6, 1, 128>}, {pipeline_mode = #tpu.pipeline_mode<synchronous>, transform_indices = @transform_13, window_bounds = array<i64: 6, 1, 128>}, {pipeline_mode = #tpu.pipeline_mode<synchronous>, transform_indices = @transform_14, window_bounds = array<i64: 6, 1, 128>}, {pipeline_mode = #tpu.pipeline_mode<synchronous>, transform_indices = @transform_15, window_bounds = array<i64: 128, 128>}, {pipeline_mode = #tpu.pipeline_mode<synchronous>, transform_indices = @transform_16, window_bounds = array<i64: 1, 128>}, {transform_indices = @transform_17, window_bounds = array<i64: 2, 8, 128>}]} {
    %c0 = arith.constant 0 : index
    %c0_0 = arith.constant 0 : index
    %c0_1 = arith.constant 0 : index
    %0 = vector.load %arg1[%c0, %c0_0, %c0_1] : memref<2x8x16xf32, #tpu.memory_space<vmem>>, vector<2x8x16xf32>
    %1 = vector.shape_cast %0 : vector<2x8x16xf32> to vector<16x16xf32>
    %2 = arith.truncf %1 : vector<16x16xf32> to vector<16x16xbf16>
    %c0_2 = arith.constant 0 : index
    %c0_3 = arith.constant 0 : index
    %3 = vector.load %arg2[%c0_2, %c0_3] : memref<16x128xbf16, #tpu.memory_space<vmem>>, vector<16x128xbf16>
    %cst = arith.constant dense<0.000000e+00> : vector<16x128xf32>
    %4 = tpu.matmul %2, %3, %cst {dimension_numbers = #tpu.dot_dimension_numbers<[1], [0], [0], [1], [0, 0, 1, 1], [], []>} : vector<16x16xbf16>, vector<16x128xbf16>, vector<16x128xf32> -> vector<16x128xf32>
    %c0_4 = arith.constant 0 : index
    %c0_5 = arith.constant 0 : index
    %5 = vector.load %arg3[%c0_4, %c0_5] : memref<1x128xf32, #tpu.memory_space<vmem>>, vector<1x128xf32>
    %6 = vector.broadcast %5 : vector<1x128xf32> to vector<16x128xf32>
    %7 = arith.addf %4, %6 : vector<16x128xf32>
    %8 = tpu.iota {dimensions = array<i32: 0>} : vector<8x8xi32>
    %9 = tpu.iota {dimensions = array<i32: 1>} : vector<8x8xi32>
    %10 = arith.cmpi sle, %9, %8 : vector<8x8xi32>
    %cst_6 = arith.constant 0.000000e+00 : f32
    %cst_7 = arith.constant 0xFF800000 : f32
    %11 = vector.broadcast %cst_6 : f32 to vector<8x8xf32>
    %12 = vector.broadcast %cst_7 : f32 to vector<8x8xf32>
    %13 = arith.select %10, %11, %12 : vector<8x8xi1>, vector<8x8xf32>
    %c0_i32 = arith.constant 0 : i32
    %c6_i32 = arith.constant 6 : i32
    %14 = arith.addi %c0_i32, %c6_i32 : i32
    %c1_i32 = arith.constant 1 : i32
    %15 = scf.for %arg19 = %c0_i32 to %14 step %c1_i32 iter_args(%arg20 = %7) -> (vector<16x128xf32>)  : i32 {
      %24 = arith.truncf %arg20 : vector<16x128xf32> to vector<16x128xbf16>
      %25 = arith.index_cast %arg19 : i32 to index
      %c0_17 = arith.constant 0 : index
      %c0_18 = arith.constant 0 : index
      %26 = vector.load %arg4[%25, %c0_17, %c0_18] : memref<6x128x384xbf16, #tpu.memory_space<vmem>>, vector<1x128x384xbf16>
      %27 = vector.shape_cast %26 : vector<1x128x384xbf16> to vector<128x384xbf16>
      %cst_19 = arith.constant dense<0.000000e+00> : vector<16x384xf32>
      %28 = tpu.matmul %24, %27, %cst_19 {dimension_numbers = #tpu.dot_dimension_numbers<[1], [0], [0], [1], [0, 0, 1, 1], [], []>} : vector<16x128xbf16>, vector<128x384xbf16>, vector<16x384xf32> -> vector<16x384xf32>
      %29 = arith.index_cast %arg19 : i32 to index
      %c0_20 = arith.constant 0 : index
      %c0_21 = arith.constant 0 : index
      %30 = vector.load %arg5[%29, %c0_20, %c0_21] : memref<6x1x384xf32, #tpu.memory_space<vmem>>, vector<1x1x384xf32>
      %31 = vector.shape_cast %30 : vector<1x1x384xf32> to vector<1x384xf32>
      %32 = vector.broadcast %31 : vector<1x384xf32> to vector<16x384xf32>
      %33 = arith.addf %28, %32 : vector<16x384xf32>
      %34 = vector.extract_strided_slice %33 {offsets = [0, 0], sizes = [16, 128], strides = [1, 1]} : vector<16x384xf32> to vector<16x128xf32>
      %35 = vector.shape_cast %34 : vector<16x128xf32> to vector<2x8x128xf32>
      %36 = vector.extract_strided_slice %33 {offsets = [0, 128], sizes = [16, 128], strides = [1, 1]} : vector<16x384xf32> to vector<16x128xf32>
      %37 = vector.shape_cast %36 : vector<16x128xf32> to vector<2x8x128xf32>
      %38 = vector.extract_strided_slice %33 {offsets = [0, 256], sizes = [16, 128], strides = [1, 1]} : vector<16x384xf32> to vector<16x128xf32>
      %39 = vector.shape_cast %38 : vector<16x128xf32> to vector<2x8x128xf32>
      %40 = arith.index_cast %arg19 : i32 to index
      %c0_22 = arith.constant 0 : index
      %c0_23 = arith.constant 0 : index
      %41 = vector.load %arg6[%40, %c0_22, %c0_23] : memref<6x128x128xbf16, #tpu.memory_space<vmem>>, vector<1x128x128xbf16>
      %42 = vector.shape_cast %41 : vector<1x128x128xbf16> to vector<128x128xbf16>
      %cst_24 = arith.constant 0.000000e+00 : f32
      %43 = vector.broadcast %cst_24 : f32 to vector<16x128xf32>
      %44 = vector.extract_strided_slice %35 {offsets = [0, 0, 0], sizes = [2, 8, 32], strides = [1, 1, 1]} : vector<2x8x128xf32> to vector<2x8x32xf32>
      %45 = arith.truncf %44 : vector<2x8x32xf32> to vector<2x8x32xbf16>
      %46 = vector.extract_strided_slice %37 {offsets = [0, 0, 0], sizes = [2, 8, 32], strides = [1, 1, 1]} : vector<2x8x128xf32> to vector<2x8x32xf32>
      %47 = arith.truncf %46 : vector<2x8x32xf32> to vector<2x8x32xbf16>
      %48 = vector.extract_strided_slice %39 {offsets = [0, 0, 0], sizes = [2, 8, 32], strides = [1, 1, 1]} : vector<2x8x128xf32> to vector<2x8x32xf32>
      %49 = arith.truncf %48 : vector<2x8x32xf32> to vector<2x8x32xbf16>
      "tpu.trace_start"() <{level = 10 : i32, message = "bqd,bkd->bqk"}> : () -> ()
      %cst_25 = arith.constant dense<0.000000e+00> : vector<2x8x8xf32>
      %50 = tpu.matmul %45, %47, %cst_25 {dimension_numbers = #tpu.dot_dimension_numbers<[2], [2], [1], [1], [0, 0, 0, 1, 1, 1], [0], [0]>} : vector<2x8x32xbf16>, vector<2x8x32xbf16>, vector<2x8x8xf32> -> vector<2x8x8xf32>
      "tpu.trace_stop"() : () -> ()
      %cst_26 = arith.constant 0.176776692 : f32
      %51 = vector.broadcast %cst_26 : f32 to vector<2x8x8xf32>
      %52 = arith.mulf %50, %51 : vector<2x8x8xf32>
      %53 = vector.shape_cast %13 : vector<8x8xf32> to vector<1x8x8xf32>
      %54 = vector.broadcast %53 : vector<1x8x8xf32> to vector<2x8x8xf32>
      %55 = arith.addf %52, %54 : vector<2x8x8xf32>
      %cst_27 = arith.constant dense<0xFF800000> : vector<2x8xf32>
      %56 = vector.multi_reduction <maximumf>, %55, %cst_27 [2] : vector<2x8x8xf32> to vector<2x8xf32>
      %57 = vector.shape_cast %56 : vector<2x8xf32> to vector<2x8x1xf32>
      %58 = vector.broadcast %57 : vector<2x8x1xf32> to vector<2x8x8xf32>
      %59 = arith.subf %55, %58 : vector<2x8x8xf32>
      %60 = math.exp %59 : vector<2x8x8xf32>
      %cst_28 = arith.constant dense<0.000000e+00> : vector<2x8xf32>
      %61 = vector.multi_reduction <add>, %60, %cst_28 [2] : vector<2x8x8xf32> to vector<2x8xf32>
      %62 = vector.shape_cast %61 : vector<2x8xf32> to vector<2x8x1xf32>
      %63 = tpu.reciprocal %62 {approx = true} : vector<2x8x1xf32> -> vector<2x8x1xf32>
      %64 = vector.broadcast %63 : vector<2x8x1xf32> to vector<2x8x8xf32>
      %65 = arith.mulf %60, %64 : vector<2x8x8xf32>
      %66 = arith.truncf %65 : vector<2x8x8xf32> to vector<2x8x8xbf16>
      "tpu.trace_start"() <{level = 10 : i32, message = "bqk,bkd->bqd"}> : () -> ()
      %cst_29 = arith.constant dense<0.000000e+00> : vector<2x8x32xf32>
      %67 = tpu.matmul %66, %49, %cst_29 {dimension_numbers = #tpu.dot_dimension_numbers<[2], [1], [1], [2], [0, 0, 0, 1, 1, 2], [0], [0]>} : vector<2x8x8xbf16>, vector<2x8x32xbf16>, vector<2x8x32xf32> -> vector<2x8x32xf32>
      "tpu.trace_stop"() : () -> ()
      %68 = vector.shape_cast %67 : vector<2x8x32xf32> to vector<16x32xf32>
      %69 = arith.truncf %68 : vector<16x32xf32> to vector<16x32xbf16>
      %70 = vector.extract_strided_slice %42 {offsets = [0, 0], sizes = [32, 128], strides = [1, 1]} : vector<128x128xbf16> to vector<32x128xbf16>
      %cst_30 = arith.constant dense<0.000000e+00> : vector<16x128xf32>
      %71 = tpu.matmul %69, %70, %cst_30 {dimension_numbers = #tpu.dot_dimension_numbers<[1], [0], [0], [1], [0, 0, 1, 1], [], []>} : vector<16x32xbf16>, vector<32x128xbf16>, vector<16x128xf32> -> vector<16x128xf32>
      %72 = arith.addf %43, %71 : vector<16x128xf32>
      %73 = vector.extract_strided_slice %35 {offsets = [0, 0, 32], sizes = [2, 8, 32], strides = [1, 1, 1]} : vector<2x8x128xf32> to vector<2x8x32xf32>
      %74 = arith.truncf %73 : vector<2x8x32xf32> to vector<2x8x32xbf16>
      %75 = vector.extract_strided_slice %37 {offsets = [0, 0, 32], sizes = [2, 8, 32], strides = [1, 1, 1]} : vector<2x8x128xf32> to vector<2x8x32xf32>
      %76 = arith.truncf %75 : vector<2x8x32xf32> to vector<2x8x32xbf16>
      %77 = vector.extract_strided_slice %39 {offsets = [0, 0, 32], sizes = [2, 8, 32], strides = [1, 1, 1]} : vector<2x8x128xf32> to vector<2x8x32xf32>
      %78 = arith.truncf %77 : vector<2x8x32xf32> to vector<2x8x32xbf16>
      "tpu.trace_start"() <{level = 10 : i32, message = "bqd,bkd->bqk"}> : () -> ()
      %cst_31 = arith.constant dense<0.000000e+00> : vector<2x8x8xf32>
      %79 = tpu.matmul %74, %76, %cst_31 {dimension_numbers = #tpu.dot_dimension_numbers<[2], [2], [1], [1], [0, 0, 0, 1, 1, 1], [0], [0]>} : vector<2x8x32xbf16>, vector<2x8x32xbf16>, vector<2x8x8xf32> -> vector<2x8x8xf32>
      "tpu.trace_stop"() : () -> ()
      %cst_32 = arith.constant 0.176776692 : f32
      %80 = vector.broadcast %cst_32 : f32 to vector<2x8x8xf32>
      %81 = arith.mulf %79, %80 : vector<2x8x8xf32>
      %82 = vector.shape_cast %13 : vector<8x8xf32> to vector<1x8x8xf32>
      %83 = vector.broadcast %82 : vector<1x8x8xf32> to vector<2x8x8xf32>
      %84 = arith.addf %81, %83 : vector<2x8x8xf32>
      %cst_33 = arith.constant dense<0xFF800000> : vector<2x8xf32>
      %85 = vector.multi_reduction <maximumf>, %84, %cst_33 [2] : vector<2x8x8xf32> to vector<2x8xf32>
      %86 = vector.shape_cast %85 : vector<2x8xf32> to vector<2x8x1xf32>
      %87 = vector.broadcast %86 : vector<2x8x1xf32> to vector<2x8x8xf32>
      %88 = arith.subf %84, %87 : vector<2x8x8xf32>
      %89 = math.exp %88 : vector<2x8x8xf32>
      %cst_34 = arith.constant dense<0.000000e+00> : vector<2x8xf32>
      %90 = vector.multi_reduction <add>, %89, %cst_34 [2] : vector<2x8x8xf32> to vector<2x8xf32>
      %91 = vector.shape_cast %90 : vector<2x8xf32> to vector<2x8x1xf32>
      %92 = tpu.reciprocal %91 {approx = true} : vector<2x8x1xf32> -> vector<2x8x1xf32>
      %93 = vector.broadcast %92 : vector<2x8x1xf32> to vector<2x8x8xf32>
      %94 = arith.mulf %89, %93 : vector<2x8x8xf32>
      %95 = arith.truncf %94 : vector<2x8x8xf32> to vector<2x8x8xbf16>
      "tpu.trace_start"() <{level = 10 : i32, message = "bqk,bkd->bqd"}> : () -> ()
      %cst_35 = arith.constant dense<0.000000e+00> : vector<2x8x32xf32>
      %96 = tpu.matmul %95, %78, %cst_35 {dimension_numbers = #tpu.dot_dimension_numbers<[2], [1], [1], [2], [0, 0, 0, 1, 1, 2], [0], [0]>} : vector<2x8x8xbf16>, vector<2x8x32xbf16>, vector<2x8x32xf32> -> vector<2x8x32xf32>
      "tpu.trace_stop"() : () -> ()
      %97 = vector.shape_cast %96 : vector<2x8x32xf32> to vector<16x32xf32>
      %98 = arith.truncf %97 : vector<16x32xf32> to vector<16x32xbf16>
      %99 = vector.extract_strided_slice %42 {offsets = [32, 0], sizes = [32, 128], strides = [1, 1]} : vector<128x128xbf16> to vector<32x128xbf16>
      %cst_36 = arith.constant dense<0.000000e+00> : vector<16x128xf32>
      %100 = tpu.matmul %98, %99, %cst_36 {dimension_numbers = #tpu.dot_dimension_numbers<[1], [0], [0], [1], [0, 0, 1, 1], [], []>} : vector<16x32xbf16>, vector<32x128xbf16>, vector<16x128xf32> -> vector<16x128xf32>
      %101 = arith.addf %72, %100 : vector<16x128xf32>
      %102 = vector.extract_strided_slice %35 {offsets = [0, 0, 64], sizes = [2, 8, 32], strides = [1, 1, 1]} : vector<2x8x128xf32> to vector<2x8x32xf32>
      %103 = arith.truncf %102 : vector<2x8x32xf32> to vector<2x8x32xbf16>
      %104 = vector.extract_strided_slice %37 {offsets = [0, 0, 64], sizes = [2, 8, 32], strides = [1, 1, 1]} : vector<2x8x128xf32> to vector<2x8x32xf32>
      %105 = arith.truncf %104 : vector<2x8x32xf32> to vector<2x8x32xbf16>
      %106 = vector.extract_strided_slice %39 {offsets = [0, 0, 64], sizes = [2, 8, 32], strides = [1, 1, 1]} : vector<2x8x128xf32> to vector<2x8x32xf32>
      %107 = arith.truncf %106 : vector<2x8x32xf32> to vector<2x8x32xbf16>
      "tpu.trace_start"() <{level = 10 : i32, message = "bqd,bkd->bqk"}> : () -> ()
      %cst_37 = arith.constant dense<0.000000e+00> : vector<2x8x8xf32>
      %108 = tpu.matmul %103, %105, %cst_37 {dimension_numbers = #tpu.dot_dimension_numbers<[2], [2], [1], [1], [0, 0, 0, 1, 1, 1], [0], [0]>} : vector<2x8x32xbf16>, vector<2x8x32xbf16>, vector<2x8x8xf32> -> vector<2x8x8xf32>
      "tpu.trace_stop"() : () -> ()
      %cst_38 = arith.constant 0.176776692 : f32
      %109 = vector.broadcast %cst_38 : f32 to vector<2x8x8xf32>
      %110 = arith.mulf %108, %109 : vector<2x8x8xf32>
      %111 = vector.shape_cast %13 : vector<8x8xf32> to vector<1x8x8xf32>
      %112 = vector.broadcast %111 : vector<1x8x8xf32> to vector<2x8x8xf32>
      %113 = arith.addf %110, %112 : vector<2x8x8xf32>
      %cst_39 = arith.constant dense<0xFF800000> : vector<2x8xf32>
      %114 = vector.multi_reduction <maximumf>, %113, %cst_39 [2] : vector<2x8x8xf32> to vector<2x8xf32>
      %115 = vector.shape_cast %114 : vector<2x8xf32> to vector<2x8x1xf32>
      %116 = vector.broadcast %115 : vector<2x8x1xf32> to vector<2x8x8xf32>
      %117 = arith.subf %113, %116 : vector<2x8x8xf32>
      %118 = math.exp %117 : vector<2x8x8xf32>
      %cst_40 = arith.constant dense<0.000000e+00> : vector<2x8xf32>
      %119 = vector.multi_reduction <add>, %118, %cst_40 [2] : vector<2x8x8xf32> to vector<2x8xf32>
      %120 = vector.shape_cast %119 : vector<2x8xf32> to vector<2x8x1xf32>
      %121 = tpu.reciprocal %120 {approx = true} : vector<2x8x1xf32> -> vector<2x8x1xf32>
      %122 = vector.broadcast %121 : vector<2x8x1xf32> to vector<2x8x8xf32>
      %123 = arith.mulf %118, %122 : vector<2x8x8xf32>
      %124 = arith.truncf %123 : vector<2x8x8xf32> to vector<2x8x8xbf16>
      "tpu.trace_start"() <{level = 10 : i32, message = "bqk,bkd->bqd"}> : () -> ()
      %cst_41 = arith.constant dense<0.000000e+00> : vector<2x8x32xf32>
      %125 = tpu.matmul %124, %107, %cst_41 {dimension_numbers = #tpu.dot_dimension_numbers<[2], [1], [1], [2], [0, 0, 0, 1, 1, 2], [0], [0]>} : vector<2x8x8xbf16>, vector<2x8x32xbf16>, vector<2x8x32xf32> -> vector<2x8x32xf32>
      "tpu.trace_stop"() : () -> ()
      %126 = vector.shape_cast %125 : vector<2x8x32xf32> to vector<16x32xf32>
      %127 = arith.truncf %126 : vector<16x32xf32> to vector<16x32xbf16>
      %128 = vector.extract_strided_slice %42 {offsets = [64, 0], sizes = [32, 128], strides = [1, 1]} : vector<128x128xbf16> to vector<32x128xbf16>
      %cst_42 = arith.constant dense<0.000000e+00> : vector<16x128xf32>
      %129 = tpu.matmul %127, %128, %cst_42 {dimension_numbers = #tpu.dot_dimension_numbers<[1], [0], [0], [1], [0, 0, 1, 1], [], []>} : vector<16x32xbf16>, vector<32x128xbf16>, vector<16x128xf32> -> vector<16x128xf32>
      %130 = arith.addf %101, %129 : vector<16x128xf32>
      %131 = vector.extract_strided_slice %35 {offsets = [0, 0, 96], sizes = [2, 8, 32], strides = [1, 1, 1]} : vector<2x8x128xf32> to vector<2x8x32xf32>
      %132 = arith.truncf %131 : vector<2x8x32xf32> to vector<2x8x32xbf16>
      %133 = vector.extract_strided_slice %37 {offsets = [0, 0, 96], sizes = [2, 8, 32], strides = [1, 1, 1]} : vector<2x8x128xf32> to vector<2x8x32xf32>
      %134 = arith.truncf %133 : vector<2x8x32xf32> to vector<2x8x32xbf16>
      %135 = vector.extract_strided_slice %39 {offsets = [0, 0, 96], sizes = [2, 8, 32], strides = [1, 1, 1]} : vector<2x8x128xf32> to vector<2x8x32xf32>
      %136 = arith.truncf %135 : vector<2x8x32xf32> to vector<2x8x32xbf16>
      "tpu.trace_start"() <{level = 10 : i32, message = "bqd,bkd->bqk"}> : () -> ()
      %cst_43 = arith.constant dense<0.000000e+00> : vector<2x8x8xf32>
      %137 = tpu.matmul %132, %134, %cst_43 {dimension_numbers = #tpu.dot_dimension_numbers<[2], [2], [1], [1], [0, 0, 0, 1, 1, 1], [0], [0]>} : vector<2x8x32xbf16>, vector<2x8x32xbf16>, vector<2x8x8xf32> -> vector<2x8x8xf32>
      "tpu.trace_stop"() : () -> ()
      %cst_44 = arith.constant 0.176776692 : f32
      %138 = vector.broadcast %cst_44 : f32 to vector<2x8x8xf32>
      %139 = arith.mulf %137, %138 : vector<2x8x8xf32>
      %140 = vector.shape_cast %13 : vector<8x8xf32> to vector<1x8x8xf32>
      %141 = vector.broadcast %140 : vector<1x8x8xf32> to vector<2x8x8xf32>
      %142 = arith.addf %139, %141 : vector<2x8x8xf32>
      %cst_45 = arith.constant dense<0xFF800000> : vector<2x8xf32>
      %143 = vector.multi_reduction <maximumf>, %142, %cst_45 [2] : vector<2x8x8xf32> to vector<2x8xf32>
      %144 = vector.shape_cast %143 : vector<2x8xf32> to vector<2x8x1xf32>
      %145 = vector.broadcast %144 : vector<2x8x1xf32> to vector<2x8x8xf32>
      %146 = arith.subf %142, %145 : vector<2x8x8xf32>
      %147 = math.exp %146 : vector<2x8x8xf32>
      %cst_46 = arith.constant dense<0.000000e+00> : vector<2x8xf32>
      %148 = vector.multi_reduction <add>, %147, %cst_46 [2] : vector<2x8x8xf32> to vector<2x8xf32>
      %149 = vector.shape_cast %148 : vector<2x8xf32> to vector<2x8x1xf32>
      %150 = tpu.reciprocal %149 {approx = true} : vector<2x8x1xf32> -> vector<2x8x1xf32>
      %151 = vector.broadcast %150 : vector<2x8x1xf32> to vector<2x8x8xf32>
      %152 = arith.mulf %147, %151 : vector<2x8x8xf32>
      %153 = arith.truncf %152 : vector<2x8x8xf32> to vector<2x8x8xbf16>
      "tpu.trace_start"() <{level = 10 : i32, message = "bqk,bkd->bqd"}> : () -> ()
      %cst_47 = arith.constant dense<0.000000e+00> : vector<2x8x32xf32>
      %154 = tpu.matmul %153, %136, %cst_47 {dimension_numbers = #tpu.dot_dimension_numbers<[2], [1], [1], [2], [0, 0, 0, 1, 1, 2], [0], [0]>} : vector<2x8x8xbf16>, vector<2x8x32xbf16>, vector<2x8x32xf32> -> vector<2x8x32xf32>
      "tpu.trace_stop"() : () -> ()
      %155 = vector.shape_cast %154 : vector<2x8x32xf32> to vector<16x32xf32>
      %156 = arith.truncf %155 : vector<16x32xf32> to vector<16x32xbf16>
      %157 = vector.extract_strided_slice %42 {offsets = [96, 0], sizes = [32, 128], strides = [1, 1]} : vector<128x128xbf16> to vector<32x128xbf16>
      %cst_48 = arith.constant dense<0.000000e+00> : vector<16x128xf32>
      %158 = tpu.matmul %156, %157, %cst_48 {dimension_numbers = #tpu.dot_dimension_numbers<[1], [0], [0], [1], [0, 0, 1, 1], [], []>} : vector<16x32xbf16>, vector<32x128xbf16>, vector<16x128xf32> -> vector<16x128xf32>
      %159 = arith.addf %130, %158 : vector<16x128xf32>
      %160 = arith.index_cast %arg19 : i32 to index
      %c0_49 = arith.constant 0 : index
      %c0_50 = arith.constant 0 : index
      %161 = vector.load %arg7[%160, %c0_49, %c0_50] : memref<6x1x128xf32, #tpu.memory_space<vmem>>, vector<1x1x128xf32>
      %162 = vector.shape_cast %161 : vector<1x1x128xf32> to vector<1x128xf32>
      %163 = vector.broadcast %162 : vector<1x128xf32> to vector<16x128xf32>
      %164 = arith.addf %159, %163 : vector<16x128xf32>
      %165 = arith.addf %arg20, %164 : vector<16x128xf32>
      %166 = arith.index_cast %arg19 : i32 to index
      %c0_51 = arith.constant 0 : index
      %c0_52 = arith.constant 0 : index
      %167 = vector.load %arg8[%166, %c0_51, %c0_52] : memref<6x1x128xf32, #tpu.memory_space<vmem>>, vector<1x1x128xf32>
      %168 = vector.shape_cast %167 : vector<1x1x128xf32> to vector<1x128xf32>
      %169 = arith.index_cast %arg19 : i32 to index
      %c0_53 = arith.constant 0 : index
      %c0_54 = arith.constant 0 : index
      %170 = vector.load %arg9[%169, %c0_53, %c0_54] : memref<6x1x128xf32, #tpu.memory_space<vmem>>, vector<1x1x128xf32>
      %171 = vector.shape_cast %170 : vector<1x1x128xf32> to vector<1x128xf32>
      %cst_55 = arith.constant dense<0.000000e+00> : vector<16xf32>
      %172 = vector.multi_reduction <add>, %165, %cst_55 [1] : vector<16x128xf32> to vector<16xf32>
      %173 = vector.shape_cast %172 : vector<16xf32> to vector<16x1xf32>
      %cst_56 = arith.constant 1.280000e+02 : f32
      %174 = vector.broadcast %cst_56 : f32 to vector<16x1xf32>
      %175 = arith.divf %173, %174 : vector<16x1xf32>
      %176 = vector.broadcast %175 : vector<16x1xf32> to vector<16x128xf32>
      %177 = arith.subf %165, %176 : vector<16x128xf32>
      %178 = arith.mulf %177, %177 : vector<16x128xf32>
      %cst_57 = arith.constant dense<0.000000e+00> : vector<16xf32>
      %179 = vector.multi_reduction <add>, %178, %cst_57 [1] : vector<16x128xf32> to vector<16xf32>
      %180 = vector.shape_cast %179 : vector<16xf32> to vector<16x1xf32>
      %cst_58 = arith.constant 1.280000e+02 : f32
      %181 = vector.broadcast %cst_58 : f32 to vector<16x1xf32>
      %182 = arith.divf %180, %181 : vector<16x1xf32>
      %cst_59 = arith.constant 9.99999974E-6 : f32
      %183 = vector.broadcast %cst_59 : f32 to vector<16x1xf32>
      %184 = arith.addf %182, %183 : vector<16x1xf32>
      %185 = math.rsqrt %184 : vector<16x1xf32>
      %186 = vector.broadcast %185 : vector<16x1xf32> to vector<16x128xf32>
      %187 = arith.mulf %177, %186 : vector<16x128xf32>
      %188 = vector.broadcast %168 : vector<1x128xf32> to vector<16x128xf32>
      %189 = arith.mulf %187, %188 : vector<16x128xf32>
      %190 = vector.broadcast %171 : vector<1x128xf32> to vector<16x128xf32>
      %191 = arith.addf %189, %190 : vector<16x128xf32>
      %192 = arith.truncf %191 : vector<16x128xf32> to vector<16x128xbf16>
      %193 = arith.index_cast %arg19 : i32 to index
      %c0_60 = arith.constant 0 : index
      %c0_61 = arith.constant 0 : index
      %194 = vector.load %arg10[%193, %c0_60, %c0_61] : memref<6x128x256xbf16, #tpu.memory_space<vmem>>, vector<1x128x256xbf16>
      %195 = vector.shape_cast %194 : vector<1x128x256xbf16> to vector<128x256xbf16>
      %cst_62 = arith.constant dense<0.000000e+00> : vector<16x256xf32>
      %196 = tpu.matmul %192, %195, %cst_62 {dimension_numbers = #tpu.dot_dimension_numbers<[1], [0], [0], [1], [0, 0, 1, 1], [], []>} : vector<16x128xbf16>, vector<128x256xbf16>, vector<16x256xf32> -> vector<16x256xf32>
      %197 = arith.index_cast %arg19 : i32 to index
      %c0_63 = arith.constant 0 : index
      %c0_64 = arith.constant 0 : index
      %198 = vector.load %arg11[%197, %c0_63, %c0_64] : memref<6x1x256xf32, #tpu.memory_space<vmem>>, vector<1x1x256xf32>
      %199 = vector.shape_cast %198 : vector<1x1x256xf32> to vector<1x256xf32>
      %200 = vector.broadcast %199 : vector<1x256xf32> to vector<16x256xf32>
      %201 = arith.addf %196, %200 : vector<16x256xf32>
      %cst_65 = arith.constant 0.000000e+00 : f32
      %202 = vector.broadcast %cst_65 : f32 to vector<16x256xf32>
      %203 = arith.maximumf %201, %202 : vector<16x256xf32>
      %204 = arith.truncf %203 : vector<16x256xf32> to vector<16x256xbf16>
      %205 = arith.index_cast %arg19 : i32 to index
      %c0_66 = arith.constant 0 : index
      %c0_67 = arith.constant 0 : index
      %206 = vector.load %arg12[%205, %c0_66, %c0_67] : memref<6x256x128xbf16, #tpu.memory_space<vmem>>, vector<1x256x128xbf16>
      %207 = vector.shape_cast %206 : vector<1x256x128xbf16> to vector<256x128xbf16>
      %cst_68 = arith.constant dense<0.000000e+00> : vector<16x128xf32>
      %208 = tpu.matmul %204, %207, %cst_68 {dimension_numbers = #tpu.dot_dimension_numbers<[1], [0], [0], [1], [0, 0, 1, 1], [], []>} : vector<16x256xbf16>, vector<256x128xbf16>, vector<16x128xf32> -> vector<16x128xf32>
      %209 = arith.index_cast %arg19 : i32 to index
      %c0_69 = arith.constant 0 : index
      %c0_70 = arith.constant 0 : index
      %210 = vector.load %arg13[%209, %c0_69, %c0_70] : memref<6x1x128xf32, #tpu.memory_space<vmem>>, vector<1x1x128xf32>
      %211 = vector.shape_cast %210 : vector<1x1x128xf32> to vector<1x128xf32>
      %212 = vector.broadcast %211 : vector<1x128xf32> to vector<16x128xf32>
      %213 = arith.addf %208, %212 : vector<16x128xf32>
      %214 = arith.addf %191, %213 : vector<16x128xf32>
      %215 = arith.index_cast %arg19 : i32 to index
      %c0_71 = arith.constant 0 : index
      %c0_72 = arith.constant 0 : index
      %216 = vector.load %arg14[%215, %c0_71, %c0_72] : memref<6x1x128xf32, #tpu.memory_space<vmem>>, vector<1x1x128xf32>
      %217 = vector.shape_cast %216 : vector<1x1x128xf32> to vector<1x128xf32>
      %218 = arith.index_cast %arg19 : i32 to index
      %c0_73 = arith.constant 0 : index
      %c0_74 = arith.constant 0 : index
      %219 = vector.load %arg15[%218, %c0_73, %c0_74] : memref<6x1x128xf32, #tpu.memory_space<vmem>>, vector<1x1x128xf32>
      %220 = vector.shape_cast %219 : vector<1x1x128xf32> to vector<1x128xf32>
      %cst_75 = arith.constant dense<0.000000e+00> : vector<16xf32>
      %221 = vector.multi_reduction <add>, %214, %cst_75 [1] : vector<16x128xf32> to vector<16xf32>
      %222 = vector.shape_cast %221 : vector<16xf32> to vector<16x1xf32>
      %cst_76 = arith.constant 1.280000e+02 : f32
      %223 = vector.broadcast %cst_76 : f32 to vector<16x1xf32>
      %224 = arith.divf %222, %223 : vector<16x1xf32>
      %225 = vector.broadcast %224 : vector<16x1xf32> to vector<16x128xf32>
      %226 = arith.subf %214, %225 : vector<16x128xf32>
      %227 = arith.mulf %226, %226 : vector<16x128xf32>
      %cst_77 = arith.constant dense<0.000000e+00> : vector<16xf32>
      %228 = vector.multi_reduction <add>, %227, %cst_77 [1] : vector<16x128xf32> to vector<16xf32>
      %229 = vector.shape_cast %228 : vector<16xf32> to vector<16x1xf32>
      %cst_78 = arith.constant 1.280000e+02 : f32
      %230 = vector.broadcast %cst_78 : f32 to vector<16x1xf32>
      %231 = arith.divf %229, %230 : vector<16x1xf32>
      %cst_79 = arith.constant 9.99999974E-6 : f32
      %232 = vector.broadcast %cst_79 : f32 to vector<16x1xf32>
      %233 = arith.addf %231, %232 : vector<16x1xf32>
      %234 = math.rsqrt %233 : vector<16x1xf32>
      %235 = vector.broadcast %234 : vector<16x1xf32> to vector<16x128xf32>
      %236 = arith.mulf %226, %235 : vector<16x128xf32>
      %237 = vector.broadcast %217 : vector<1x128xf32> to vector<16x128xf32>
      %238 = arith.mulf %236, %237 : vector<16x128xf32>
      %239 = vector.broadcast %220 : vector<1x128xf32> to vector<16x128xf32>
      %240 = arith.addf %238, %239 : vector<16x128xf32>
      scf.yield %240 : vector<16x128xf32>
    }
    %c6_i32_8 = arith.constant 6 : i32
    %16 = arith.truncf %15 : vector<16x128xf32> to vector<16x128xbf16>
    %c0_9 = arith.constant 0 : index
    %c0_10 = arith.constant 0 : index
    %17 = vector.load %arg16[%c0_9, %c0_10] : memref<128x128xbf16, #tpu.memory_space<vmem>>, vector<128x128xbf16>
    %cst_11 = arith.constant dense<0.000000e+00> : vector<16x128xf32>
    %18 = tpu.matmul %16, %17, %cst_11 {dimension_numbers = #tpu.dot_dimension_numbers<[1], [0], [0], [1], [0, 0, 1, 1], [], []>} : vector<16x128xbf16>, vector<128x128xbf16>, vector<16x128xf32> -> vector<16x128xf32>
    %c0_12 = arith.constant 0 : index
    %c0_13 = arith.constant 0 : index
    %19 = vector.load %arg17[%c0_12, %c0_13] : memref<1x128xf32, #tpu.memory_space<vmem>>, vector<1x128xf32>
    %20 = vector.broadcast %19 : vector<1x128xf32> to vector<16x128xf32>
    %21 = arith.addf %18, %20 : vector<16x128xf32>
    %22 = vector.shape_cast %21 : vector<16x128xf32> to vector<2x8x128xf32>
    %c0_14 = arith.constant 0 : index
    %c0_15 = arith.constant 0 : index
    %c0_16 = arith.constant 0 : index
    %23 = vector.load %arg18[%c0_14, %c0_15, %c0_16] : memref<2x8x128xf32, #tpu.memory_space<vmem>>, vector<2x8x128xf32>
    tpu.vector_store %arg18[%c0_14, %c0_15, %c0_16], %22 {strides = array<i32>} : memref<2x8x128xf32, #tpu.memory_space<vmem>>, vector<2x8x128xf32>,
    return
  }
  func.func @transform_0(%arg0: i32) -> (i32, i32, i32) {
    %c0_i32 = arith.constant 0 : i32
    %c0_i32_0 = arith.constant 0 : i32
    %c0_i32_1 = arith.constant 0 : i32
    return %arg0, %c0_i32, %c0_i32_0 : i32, i32, i32
  }
  func.func @transform_1(%arg0: i32) -> (i32, i32) {
    %c0_i32 = arith.constant 0 : i32
    %c0_i32_0 = arith.constant 0 : i32
    %c0_i32_1 = arith.constant 0 : i32
    return %c0_i32, %c0_i32_0 : i32, i32
  }
  func.func @transform_2(%arg0: i32) -> (i32, i32) {
    %c0_i32 = arith.constant 0 : i32
    %c0_i32_0 = arith.constant 0 : i32
    %c0_i32_1 = arith.constant 0 : i32
    return %c0_i32, %c0_i32_0 : i32, i32
  }
  func.func @transform_3(%arg0: i32) -> (i32, i32, i32) {
    %c0_i32 = arith.constant 0 : i32
    %c0_i32_0 = arith.constant 0 : i32
    %c0_i32_1 = arith.constant 0 : i32
    %c0_i32_2 = arith.constant 0 : i32
    return %c0_i32, %c0_i32_0, %c0_i32_1 : i32, i32, i32
  }
  func.func @transform_4(%arg0: i32) -> (i32, i32, i32) {
    %c0_i32 = arith.constant 0 : i32
    %c0_i32_0 = arith.constant 0 : i32
    %c0_i32_1 = arith.constant 0 : i32
    %c0_i32_2 = arith.constant 0 : i32
    return %c0_i32, %c0_i32_0, %c0_i32_1 : i32, i32, i32
  }
  func.func @transform_5(%arg0: i32) -> (i32, i32, i32) {
    %c0_i32 = arith.constant 0 : i32
    %c0_i32_0 = arith.constant 0 : i32
    %c0_i32_1 = arith.constant 0 : i32
    %c0_i32_2 = arith.constant 0 : i32
    return %c0_i32, %c0_i32_0, %c0_i32_1 : i32, i32, i32
  }
  func.func @transform_6(%arg0: i32) -> (i32, i32, i32) {
    %c0_i32 = arith.constant 0 : i32
    %c0_i32_0 = arith.constant 0 : i32
    %c0_i32_1 = arith.constant 0 : i32
    %c0_i32_2 = arith.constant 0 : i32
    return %c0_i32, %c0_i32_0, %c0_i32_1 : i32, i32, i32
  }
  func.func @transform_7(%arg0: i32) -> (i32, i32, i32) {
    %c0_i32 = arith.constant 0 : i32
    %c0_i32_0 = arith.constant 0 : i32
    %c0_i32_1 = arith.constant 0 : i32
    %c0_i32_2 = arith.constant 0 : i32
    return %c0_i32, %c0_i32_0, %c0_i32_1 : i32, i32, i32
  }
  func.func @transform_8(%arg0: i32) -> (i32, i32, i32) {
    %c0_i32 = arith.constant 0 : i32
    %c0_i32_0 = arith.constant 0 : i32
    %c0_i32_1 = arith.constant 0 : i32
    %c0_i32_2 = arith.constant 0 : i32
    return %c0_i32, %c0_i32_0, %c0_i32_1 : i32, i32, i32
  }
  func.func @transform_9(%arg0: i32) -> (i32, i32, i32) {
    %c0_i32 = arith.constant 0 : i32
    %c0_i32_0 = arith.constant 0 : i32
    %c0_i32_1 = arith.constant 0 : i32
    %c0_i32_2 = arith.constant 0 : i32
    return %c0_i32, %c0_i32_0, %c0_i32_1 : i32, i32, i32
  }
  func.func @transform_10(%arg0: i32) -> (i32, i32, i32) {
    %c0_i32 = arith.constant 0 : i32
    %c0_i32_0 = arith.constant 0 : i32
    %c0_i32_1 = arith.constant 0 : i32
    %c0_i32_2 = arith.constant 0 : i32
    return %c0_i32, %c0_i32_0, %c0_i32_1 : i32, i32, i32
  }
  func.func @transform_11(%arg0: i32) -> (i32, i32, i32) {
    %c0_i32 = arith.constant 0 : i32
    %c0_i32_0 = arith.constant 0 : i32
    %c0_i32_1 = arith.constant 0 : i32
    %c0_i32_2 = arith.constant 0 : i32
    return %c0_i32, %c0_i32_0, %c0_i32_1 : i32, i32, i32
  }
  func.func @transform_12(%arg0: i32) -> (i32, i32, i32) {
    %c0_i32 = arith.constant 0 : i32
    %c0_i32_0 = arith.constant 0 : i32
    %c0_i32_1 = arith.constant 0 : i32
    %c0_i32_2 = arith.constant 0 : i32
    return %c0_i32, %c0_i32_0, %c0_i32_1 : i32, i32, i32
  }
  func.func @transform_13(%arg0: i32) -> (i32, i32, i32) {
    %c0_i32 = arith.constant 0 : i32
    %c0_i32_0 = arith.constant 0 : i32
    %c0_i32_1 = arith.constant 0 : i32
    %c0_i32_2 = arith.constant 0 : i32
    return %c0_i32, %c0_i32_0, %c0_i32_1 : i32, i32, i32
  }
  func.func @transform_14(%arg0: i32) -> (i32, i32, i32) {
    %c0_i32 = arith.constant 0 : i32
    %c0_i32_0 = arith.constant 0 : i32
    %c0_i32_1 = arith.constant 0 : i32
    %c0_i32_2 = arith.constant 0 : i32
    return %c0_i32, %c0_i32_0, %c0_i32_1 : i32, i32, i32
  }
  func.func @transform_15(%arg0: i32) -> (i32, i32) {
    %c0_i32 = arith.constant 0 : i32
    %c0_i32_0 = arith.constant 0 : i32
    %c0_i32_1 = arith.constant 0 : i32
    return %c0_i32, %c0_i32_0 : i32, i32
  }
  func.func @transform_16(%arg0: i32) -> (i32, i32) {
    %c0_i32 = arith.constant 0 : i32
    %c0_i32_0 = arith.constant 0 : i32
    %c0_i32_1 = arith.constant 0 : i32
    return %c0_i32, %c0_i32_0 : i32, i32
  }
  func.func @transform_17(%arg0: i32) -> (i32, i32, i32) {
    %c0_i32 = arith.constant 0 : i32
    %c0_i32_0 = arith.constant 0 : i32
    %c0_i32_1 = arith.constant 0 : i32
    return %arg0, %c0_i32, %c0_i32_0 : i32, i32, i32
  }
}

</mosaic_0001>

<llo_original>
// kernel: tpu_custom_call.1
$region0: #{tpu_custom_call.1}
  #allocation0 [shape = 'u32[]', space=smem, size = 0x4, offset = 0x4, fixed_abs, tag = 'smem constant byte address 0x4 - core index']
  #allocation1 [shape = 'u32[72,128]{1,0:T(1,128)}', space=vmem, size = 0x9000, scoped, tag = 'internal scratch']
  %s0 = inlined_call_operand.hbm [shape: f32[2,8,16], index: 0, kind: input, shape index: {}]
  %s1 = inlined_call_operand.hbm [shape: bf16[16,128], index: 1, kind: input, shape index: {}]
  %s2 = inlined_call_operand.hbm [shape: f32[1,128], index: 2, kind: input, shape index: {}]
  %s3 = inlined_call_operand.hbm [shape: bf16[6,128,384], index: 3, kind: input, shape index: {}]
  %s4 = inlined_call_operand.hbm [shape: f32[6,1,384], index: 4, kind: input, shape index: {}]
  %s5 = inlined_call_operand.hbm [shape: bf16[6,128,128], index: 5, kind: input, shape index: {}]
  %s6 = inlined_call_operand.hbm [shape: f32[6,1,128], index: 6, kind: input, shape index: {}]
  %s7 = inlined_call_operand.vmem [shape: f32[6,1,128], index: 7, kind: input, shape index: {}]
  %s8 = inlined_call_operand.hbm [shape: f32[6,1,128], index: 8, kind: input, shape index: {}]
  %s9 = inlined_call_operand.hbm [shape: bf16[6,128,256], index: 9, kind: input, shape index: {}]
  %s10 = inlined_call_operand.hbm [shape: f32[6,1,256], index: 10, kind: input, shape index: {}]
  %s11 = inlined_call_operand.hbm [shape: bf16[6,256,128], index: 11, kind: input, shape index: {}]
  %s12 = inlined_call_operand.hbm [shape: f32[6,1,128], index: 12, kind: input, shape index: {}]
  %s13 = inlined_call_operand.vmem [shape: f32[6,1,128], index: 13, kind: input, shape index: {}]
  %s14 = inlined_call_operand.hbm [shape: f32[6,1,128], index: 14, kind: input, shape index: {}]
  %s15 = inlined_call_operand.hbm [shape: bf16[128,128], index: 15, kind: input, shape index: {}]
  %s16 = inlined_call_operand.vmem [shape: f32[1,128], index: 16, kind: input, shape index: {}]
  %s17 = inlined_call_operand.hbm [shape: f32[2,8,128], index: 17, kind: output, shape index: {}]
  %s18 = sld [smem:[#allocation0]]
  $region141: #{tpu_custom_call.1} parent=0
    _
  %s20 = ssub.s32 1, %s18
  %s21 = scalar_select 0, %s20, %s18
  $region1: #{tpu_custom_call.1} parent=0
    #allocation2 [shape = 'u8[8192]{0}', space=vmem, size = 0x2000, scoped, tag = 'input window, operand 0, single buffered']
    #allocation3 [shape = 's32[1]{0}', space=sflag, size = 0x4, scoped, tag = 'scoped memory for tpu_custom_call.1']
    #allocation4 [shape = 's32[1]{0}', space=sflag, size = 0x4, scoped, tag = 'scoped memory for tpu_custom_call.1']
    #allocation5 [shape = 'u8[4096]{0}', space=vmem, size = 0x1000, scoped, tag = 'input window, operand 1, single buffered']
    #allocation6 [shape = 's32[1]{0}', space=sflag, size = 0x4, scoped, tag = 'scoped memory for tpu_custom_call.1']
    #allocation7 [shape = 'u8[512]{0}', space=vmem, size = 0x400, scoped, tag = 'input window, operand 2, single buffered']
    #allocation8 [shape = 'u8[589824]{0}', space=vmem, size = 0x90000, scoped, tag = 'input window, operand 3, single buffered']
    #allocation9 [shape = 's32[1]{0}', space=sflag, size = 0x4, scoped, tag = 'scoped memory for tpu_custom_call.1']
    #allocation10 [shape = 'u8[9216]{0}', space=vmem, size = 0x2400, scoped, tag = 'input window, operand 4, single buffered']
    #allocation11 [shape = 'u8[196608]{0}', space=vmem, size = 0x30000, scoped, tag = 'input window, operand 5, single buffered']
    #allocation12 [shape = 's32[1]{0}', space=sflag, size = 0x4, scoped, tag = 'scoped memory for tpu_custom_call.1']
    #allocation13 [shape = 'u8[3072]{0}', space=vmem, size = 0xc00, scoped, tag = 'input window, operand 6, single buffered']
    #allocation14 [shape = 'u8[3072]{0}', space=vmem, size = 0xc00, scoped, tag = 'input window, operand 8, single buffered']
    #allocation15 [shape = 's32[1]{0}', space=sflag, size = 0x4, scoped, tag = 'scoped memory for tpu_custom_call.1']
    #allocation16 [shape = 'u8[393216]{0}', space=vmem, size = 0x60000, scoped, tag = 'input window, operand 9, single buffered']
    #allocation17 [shape = 'u8[6144]{0}', space=vmem, size = 0x1800, scoped, tag = 'input window, operand 10, single buffered']
    #allocation18 [shape = 's32[1]{0}', space=sflag, size = 0x4, scoped, tag = 'scoped memory for tpu_custom_call.1']
    #allocation19 [shape = 'u8[393216]{0}', space=vmem, size = 0x60000, scoped, tag = 'input window, operand 11, single buffered']
    #allocation20 [shape = 'u8[3072]{0}', space=vmem, size = 0xc00, scoped, tag = 'input window, operand 12, single buffered']
    #allocation21 [shape = 's32[1]{0}', space=sflag, size = 0x4, scoped, tag = 'scoped memory for tpu_custom_call.1']
    #allocation22 [shape = 'u8[3072]{0}', space=vmem, size = 0xc00, scoped, tag = 'input window, operand 14, single buffered']
    #allocation23 [shape = 'u8[32768]{0}', space=vmem, size = 0x8000, scoped, tag = 'input window, operand 15, single buffered']
    #allocation24 [shape = 's32[1]{0}', space=sflag, size = 0x4, scoped, tag = 'scoped memory for tpu_custom_call.1']
    #allocation25 [shape = 'u8[8192]{0}', space=vmem, size = 0x2000, scoped, tag = 'output window, operand 0, single buffered']
    %22 = vsyncpa [#allocation3], 0
    %23 = vsyncpa [#allocation6], 0
    %24 = vsyncpa [#allocation9], 0
    %25 = vsyncpa [#allocation12], 0
    %26 = vsyncpa [#allocation15], 0
    %27 = vsyncpa [#allocation18], 0
    %28 = vsyncpa [#allocation21], 0
    %29 = vsyncpa [#allocation24], 0
    %30 = vsyncpa [#allocation4], 0
    // Predicated region
    $region2: #{tpu_custom_call.1} parent=1 // pred_check
      _
    $region3: #{tpu_custom_call.1} parent=1 // pred_check_branch
      %32 = sbr.rel (0) target = $region5
    $region4: #{tpu_custom_call.1} parent=1 // pred_region
      %34 = vsyncadd [#allocation3], 0
      %s35 = sshll.u32 %s0, 4
      %s36 = int_to_ptr.hbm [resolvable:$true] %s35
      %s37 = sshll.u32 [#allocation2], 4
      %s38 = int_to_ptr.vmem [resolvable:$true] %s37
      %43 = dma.hbm_to_vmem [thread:$0]  %s36, 256, %s38, [#allocation3], 128, 128, 8
    $region5: #{tpu_custom_call.1} parent=1 // pred_fallthru
      _
    // Predicated region
    $region6: #{tpu_custom_call.1} parent=1 // pred_check
      _
    $region7: #{tpu_custom_call.1} parent=1 // pred_check_branch
      %45 = sbr.rel (0) target = $region9
    $region8: #{tpu_custom_call.1} parent=1 // pred_region
      %47 = vsyncadd [#allocation6], 0
      %s48 = sshll.u32 %s1, 4
      %s49 = int_to_ptr.hbm [resolvable:$true] %s48
      %s50 = sshll.u32 [#allocation5], 4
      %s51 = int_to_ptr.vmem [resolvable:$true] %s50
      %56 = dma.hbm_to_vmem [thread:$0]  %s49, 128, %s51, [#allocation6], 64, 64, 4
    $region9: #{tpu_custom_call.1} parent=1 // pred_fallthru
      _
    // Predicated region
    $region10: #{tpu_custom_call.1} parent=1 // pred_check
      _
    $region11: #{tpu_custom_call.1} parent=1 // pred_check_branch
      %58 = sbr.rel (0) target = $region13
    $region12: #{tpu_custom_call.1} parent=1 // pred_region
      %60 = vsyncadd [#allocation6], 0
      %s62 = sshll.u32 %s2, 4
      %s63 = int_to_ptr.hbm [resolvable:$true] %s62
      %s64 = sshll.u32 [#allocation7], 4
      %s65 = int_to_ptr.vmem [resolvable:$true] %s64
      %67 = dma.hbm_to_vmem [thread:$0]  %s63, 16, %s65, [#allocation6]
    $region13: #{tpu_custom_call.1} parent=1 // pred_fallthru
      _
    // Predicated region
    $region14: #{tpu_custom_call.1} parent=1 // pred_check
      _
    $region15: #{tpu_custom_call.1} parent=1 // pred_check_branch
      %69 = sbr.rel (0) target = $region17
    $region16: #{tpu_custom_call.1} parent=1 // pred_region
      %71 = vsyncadd [#allocation9], 0
      %s72 = sshll.u32 %s3, 4
      %s73 = int_to_ptr.hbm [resolvable:$true] %s72
      %s74 = sshll.u32 [#allocation8], 4
      %s75 = int_to_ptr.vmem [resolvable:$true] %s74
      %80 = dma.hbm_to_vmem [thread:$0]  %s73, 18432, %s75, [#allocation9], 192, 192, 12
    $region17: #{tpu_custom_call.1} parent=1 // pred_fallthru
      _
    // Predicated region
    $region18: #{tpu_custom_call.1} parent=1 // pred_check
      _
    $region19: #{tpu_custom_call.1} parent=1 // pred_check_branch
      %82 = sbr.rel (0) target = $region21
    $region20: #{tpu_custom_call.1} parent=1 // pred_region
      %84 = vsyncadd [#allocation9], 0
      %s85 = sshll.u32 %s4, 4
      %s86 = int_to_ptr.hbm [resolvable:$true] %s85
      %s87 = sshll.u32 [#allocation10], 4
      %s88 = int_to_ptr.vmem [resolvable:$true] %s87
      %93 = dma.hbm_to_vmem [thread:$0]  %s86, 288, %s88, [#allocation9], 48, 48, 3
    $region21: #{tpu_custom_call.1} parent=1 // pred_fallthru
      _
    // Predicated region
    $region22: #{tpu_custom_call.1} parent=1 // pred_check
      _
    $region23: #{tpu_custom_call.1} parent=1 // pred_check_branch
      %95 = sbr.rel (0) target = $region25
    $region24: #{tpu_custom_call.1} parent=1 // pred_region
      %97 = vsyncadd [#allocation12], 0
      %s98 = sshll.u32 %s5, 4
      %s99 = int_to_ptr.hbm [resolvable:$true] %s98
      %s100 = sshll.u32 [#allocation11], 4
      %s101 = int_to_ptr.vmem [resolvable:$true] %s100
      %106 = dma.hbm_to_vmem [thread:$0]  %s99, 6144, %s101, [#allocation12], 64, 64, 4
    $region25: #{tpu_custom_call.1} parent=1 // pred_fallthru
      _
    // Predicated region
    $region26: #{tpu_custom_call.1} parent=1 // pred_check
      _
    $region27: #{tpu_custom_call.1} parent=1 // pred_check_branch
      %108 = sbr.rel (0) target = $region29
    $region28: #{tpu_custom_call.1} parent=1 // pred_region
      %110 = vsyncadd [#allocation12], 0
      %s111 = sshll.u32 %s6, 4
      %s112 = int_to_ptr.hbm [resolvable:$true] %s111
      %s113 = sshll.u32 [#allocation13], 4
      %s114 = int_to_ptr.vmem [resolvable:$true] %s113
      %119 = dma.hbm_to_vmem [thread:$0]  %s112, 96, %s114, [#allocation12], 16, 16, 1
    $region29: #{tpu_custom_call.1} parent=1 // pred_fallthru
      _
    // Predicated region
    $region30: #{tpu_custom_call.1} parent=1 // pred_check
      _
    $region31: #{tpu_custom_call.1} parent=1 // pred_check_branch
      %121 = sbr.rel (0) target = $region33
    $region32: #{tpu_custom_call.1} parent=1 // pred_region
      _
    $region33: #{tpu_custom_call.1} parent=1 // pred_fallthru
      _
    // Predicated region
    $region34: #{tpu_custom_call.1} parent=1 // pred_check
      _
    $region35: #{tpu_custom_call.1} parent=1 // pred_check_branch
      %123 = sbr.rel (0) target = $region37
    $region36: #{tpu_custom_call.1} parent=1 // pred_region
      %125 = vsyncadd [#allocation15], 0
      %s126 = sshll.u32 %s8, 4
      %s127 = int_to_ptr.hbm [resolvable:$true] %s126
      %s128 = sshll.u32 [#allocation14], 4
      %s129 = int_to_ptr.vmem [resolvable:$true] %s128
      %134 = dma.hbm_to_vmem [thread:$0]  %s127, 96, %s129, [#allocation15], 16, 16, 1
    $region37: #{tpu_custom_call.1} parent=1 // pred_fallthru
      _
    // Predicated region
    $region38: #{tpu_custom_call.1} parent=1 // pred_check
      _
    $region39: #{tpu_custom_call.1} parent=1 // pred_check_branch
      %136 = sbr.rel (0) target = $region41
    $region40: #{tpu_custom_call.1} parent=1 // pred_region
      %138 = vsyncadd [#allocation15], 0
      %s139 = sshll.u32 %s9, 4
      %s140 = int_to_ptr.hbm [resolvable:$true] %s139
      %s141 = sshll.u32 [#allocation16], 4
      %s142 = int_to_ptr.vmem [resolvable:$true] %s141
      %147 = dma.hbm_to_vmem [thread:$0]  %s140, 12288, %s142, [#allocation15], 128, 128, 8
    $region41: #{tpu_custom_call.1} parent=1 // pred_fallthru
      _
    // Predicated region
    $region42: #{tpu_custom_call.1} parent=1 // pred_check
      _
    $region43: #{tpu_custom_call.1} parent=1 // pred_check_branch
      %149 = sbr.rel (0) target = $region45
    $region44: #{tpu_custom_call.1} parent=1 // pred_region
      %151 = vsyncadd [#allocation18], 0
      %s152 = sshll.u32 %s10, 4
      %s153 = int_to_ptr.hbm [resolvable:$true] %s152
      %s154 = sshll.u32 [#allocation17], 4
      %s155 = int_to_ptr.vmem [resolvable:$true] %s154
      %160 = dma.hbm_to_vmem [thread:$0]  %s153, 192, %s155, [#allocation18], 32, 32, 2
    $region45: #{tpu_custom_call.1} parent=1 // pred_fallthru
      _
    // Predicated region
    $region46: #{tpu_custom_call.1} parent=1 // pred_check
      _
    $region47: #{tpu_custom_call.1} parent=1 // pred_check_branch
      %162 = sbr.rel (0) target = $region49
    $region48: #{tpu_custom_call.1} parent=1 // pred_region
      %164 = vsyncadd [#allocation18], 0
      %s165 = sshll.u32 %s11, 4
      %s166 = int_to_ptr.hbm [resolvable:$true] %s165
      %s167 = sshll.u32 [#allocation19], 4
      %s168 = int_to_ptr.vmem [resolvable:$true] %s167
      %173 = dma.hbm_to_vmem [thread:$0]  %s166, 12288, %s168, [#allocation18], 64, 64, 4
    $region49: #{tpu_custom_call.1} parent=1 // pred_fallthru
      _
    // Predicated region
    $region50: #{tpu_custom_call.1} parent=1 // pred_check
      _
    $region51: #{tpu_custom_call.1} parent=1 // pred_check_branch
      %175 = sbr.rel (0) target = $region53
    $region52: #{tpu_custom_call.1} parent=1 // pred_region
      %177 = vsyncadd [#allocation21], 0
      %s178 = sshll.u32 %s12, 4
      %s179 = int_to_ptr.hbm [resolvable:$true] %s178
      %s180 = sshll.u32 [#allocation20], 4
      %s181 = int_to_ptr.vmem [resolvable:$true] %s180
      %186 = dma.hbm_to_vmem [thread:$0]  %s179, 96, %s181, [#allocation21], 16, 16, 1
    $region53: #{tpu_custom_call.1} parent=1 // pred_fallthru
      _
    // Predicated region
    $region54: #{tpu_custom_call.1} parent=1 // pred_check
      _
    $region55: #{tpu_custom_call.1} parent=1 // pred_check_branch
      %188 = sbr.rel (0) target = $region57
    $region56: #{tpu_custom_call.1} parent=1 // pred_region
      _
    $region57: #{tpu_custom_call.1} parent=1 // pred_fallthru
      _
    // Predicated region
    $region58: #{tpu_custom_call.1} parent=1 // pred_check
      _
    $region59: #{tpu_custom_call.1} parent=1 // pred_check_branch
      %190 = sbr.rel (0) target = $region61
    $region60: #{tpu_custom_call.1} parent=1 // pred_region
      %192 = vsyncadd [#allocation21], 0
      %s193 = sshll.u32 %s14, 4
      %s194 = int_to_ptr.hbm [resolvable:$true] %s193
      %s195 = sshll.u32 [#allocation22], 4
      %s196 = int_to_ptr.vmem [resolvable:$true] %s195
      %201 = dma.hbm_to_vmem [thread:$0]  %s194, 96, %s196, [#allocation21], 16, 16, 1
    $region61: #{tpu_custom_call.1} parent=1 // pred_fallthru
      _
    // Predicated region
    $region62: #{tpu_custom_call.1} parent=1 // pred_check
      _
    $region63: #{tpu_custom_call.1} parent=1 // pred_check_branch
      %203 = sbr.rel (0) target = $region65
    $region64: #{tpu_custom_call.1} parent=1 // pred_region
      %205 = vsyncadd [#allocation24], 0
      %s206 = sshll.u32 %s15, 4
      %s207 = int_to_ptr.hbm [resolvable:$true] %s206
      %s208 = sshll.u32 [#allocation23], 4
      %s209 = int_to_ptr.vmem [resolvable:$true] %s208
      %214 = dma.hbm_to_vmem [thread:$0]  %s207, 1024, %s209, [#allocation24], 64, 64, 4
    $region65: #{tpu_custom_call.1} parent=1 // pred_fallthru
      _
    // Predicated region
    $region66: #{tpu_custom_call.1} parent=1 // pred_check
      _
    $region67: #{tpu_custom_call.1} parent=1 // pred_check_branch
      %216 = sbr.rel (0) target = $region69
    $region68: #{tpu_custom_call.1} parent=1 // pred_region
      _
    $region69: #{tpu_custom_call.1} parent=1 // pred_fallthru
      _
    // Predicated region
    $region70: #{tpu_custom_call.1} parent=1 // pred_check
      _
    $region71: #{tpu_custom_call.1} parent=1 // pred_check_branch
      %218 = sbr.rel (0) target = $region73
    $region72: #{tpu_custom_call.1} parent=1 // pred_region
      %220 = dma.done [#allocation3], 256
    $region73: #{tpu_custom_call.1} parent=1 // pred_fallthru
      _
    // Predicated region
    $region74: #{tpu_custom_call.1} parent=1 // pred_check
      _
    $region75: #{tpu_custom_call.1} parent=1 // pred_check_branch
      %222 = sbr.rel (0) target = $region77
    $region76: #{tpu_custom_call.1} parent=1 // pred_region
      %224 = dma.done [#allocation6], 128
    $region77: #{tpu_custom_call.1} parent=1 // pred_fallthru
      _
    // Predicated region
    $region78: #{tpu_custom_call.1} parent=1 // pred_check
      _
    $region79: #{tpu_custom_call.1} parent=1 // pred_check_branch
      %226 = sbr.rel (0) target = $region81
    $region80: #{tpu_custom_call.1} parent=1 // pred_region
      %228 = dma.done [#allocation6], 16
    $region81: #{tpu_custom_call.1} parent=1 // pred_fallthru
      _
    // Predicated region
    $region82: #{tpu_custom_call.1} parent=1 // pred_check
      _
    $region83: #{tpu_custom_call.1} parent=1 // pred_check_branch
      %230 = sbr.rel (0) target = $region85
    $region84: #{tpu_custom_call.1} parent=1 // pred_region
      %232 = dma.done [#allocation9], 18432
    $region85: #{tpu_custom_call.1} parent=1 // pred_fallthru
      _
    // Predicated region
    $region86: #{tpu_custom_call.1} parent=1 // pred_check
      _
    $region87: #{tpu_custom_call.1} parent=1 // pred_check_branch
      %234 = sbr.rel (0) target = $region89
    $region88: #{tpu_custom_call.1} parent=1 // pred_region
      %236 = dma.done [#allocation9], 288
    $region89: #{tpu_custom_call.1} parent=1 // pred_fallthru
      _
    // Predicated region
    $region90: #{tpu_custom_call.1} parent=1 // pred_check
      _
    $region91: #{tpu_custom_call.1} parent=1 // pred_check_branch
      %238 = sbr.rel (0) target = $region93
    $region92: #{tpu_custom_call.1} parent=1 // pred_region
      %240 = dma.done [#allocation12], 6144
    $region93: #{tpu_custom_call.1} parent=1 // pred_fallthru
      _
    // Predicated region
    $region94: #{tpu_custom_call.1} parent=1 // pred_check
      _
    $region95: #{tpu_custom_call.1} parent=1 // pred_check_branch
      %242 = sbr.rel (0) target = $region97
    $region96: #{tpu_custom_call.1} parent=1 // pred_region
      %244 = dma.done [#allocation12], 96
    $region97: #{tpu_custom_call.1} parent=1 // pred_fallthru
      _
    // Predicated region
    $region98: #{tpu_custom_call.1} parent=1 // pred_check
      _
    $region99: #{tpu_custom_call.1} parent=1 // pred_check_branch
      %246 = sbr.rel (0) target = $region101
    $region100: #{tpu_custom_call.1} parent=1 // pred_region
      %248 = dma.done [#allocation15], 96
    $region101: #{tpu_custom_call.1} parent=1 // pred_fallthru
      _
    // Predicated region
    $region102: #{tpu_custom_call.1} parent=1 // pred_check
      _
    $region103: #{tpu_custom_call.1} parent=1 // pred_check_branch
      %250 = sbr.rel (0) target = $region105
    $region104: #{tpu_custom_call.1} parent=1 // pred_region
      %252 = dma.done [#allocation15], 12288
    $region105: #{tpu_custom_call.1} parent=1 // pred_fallthru
      _
    // Predicated region
    $region106: #{tpu_custom_call.1} parent=1 // pred_check
      _
    $region107: #{tpu_custom_call.1} parent=1 // pred_check_branch
      %254 = sbr.rel (0) target = $region109
    $region108: #{tpu_custom_call.1} parent=1 // pred_region
      %256 = dma.done [#allocation18], 192
    $region109: #{tpu_custom_call.1} parent=1 // pred_fallthru
      _
    // Predicated region
    $region110: #{tpu_custom_call.1} parent=1 // pred_check
      _
    $region111: #{tpu_custom_call.1} parent=1 // pred_check_branch
      %258 = sbr.rel (0) target = $region113
    $region112: #{tpu_custom_call.1} parent=1 // pred_region
      %260 = dma.done [#allocation18], 12288
    $region113: #{tpu_custom_call.1} parent=1 // pred_fallthru
      _
    // Predicated region
    $region114: #{tpu_custom_call.1} parent=1 // pred_check
      _
    $region115: #{tpu_custom_call.1} parent=1 // pred_check_branch
      %262 = sbr.rel (0) target = $region117
    $region116: #{tpu_custom_call.1} parent=1 // pred_region
      %264 = dma.done [#allocation21], 96
    $region117: #{tpu_custom_call.1} parent=1 // pred_fallthru
      _
    // Predicated region
    $region118: #{tpu_custom_call.1} parent=1 // pred_check
      _
    $region119: #{tpu_custom_call.1} parent=1 // pred_check_branch
      %266 = sbr.rel (0) target = $region121
    $region120: #{tpu_custom_call.1} parent=1 // pred_region
      %268 = dma.done [#allocation21], 96
    $region121: #{tpu_custom_call.1} parent=1 // pred_fallthru
      _
    // Predicated region
    $region122: #{tpu_custom_call.1} parent=1 // pred_check
      _
    $region123: #{tpu_custom_call.1} parent=1 // pred_check_branch
      %270 = sbr.rel (0) target = $region125
    $region124: #{tpu_custom_call.1} parent=1 // pred_region
      %272 = dma.done [#allocation24], 1024
    $region125: #{tpu_custom_call.1} parent=1 // pred_fallthru
      _
    %v274 = vld [vmem:[#allocation2] sm:$0xff]
    %v275 = vld [vmem:[#allocation2 + $0x8] sm:$0xff]
    %v276 = vpack.c.bf16 %v275, %v274
    %v277 = vld [vmem:[#allocation5] sm:$0xf]
    %v278 = vld [vmem:[#allocation5 + $0x4] sm:$0xf]
    %v279 = vld [vmem:[#allocation7] sm:$0x1]
    %v281 = vperm.slane %v279, 0
    %v285 = vunpack.c.l.b16 %v277
    %v286 = vunpack.c.l.b16 %v278
    %v287 = vpack.c.b16 %v286, %v285
    %vm289 = vcmask 130048
    %v291 = vsel %vm289, %v276, 0
    %293 = vmatpush.bf16.msra.mxu0 0
    %294 = vmatpush.bf16.msra.mxu0 0
    %295 = vmatpush.bf16.msra.mxu0 0
    %296 = vmatpush.bf16.msra.mxu0 0
    %297 = vmatpush.bf16.msra.mxu0 0
    %298 = vmatpush.bf16.msra.mxu0 0
    %299 = vmatpush.bf16.msra.mxu0 0
    %300 = vmatpush.bf16.msra.mxu0 %v287
    %301 = vmatmul.bf16.gmra.mxu0 %v291
    %v302 = vpop.f32.mrf.mxu0
    %v303 = vadd.f32 %v281, %v302
    %v304 = vpop.f32.mrf.mxu0
    %v305 = vadd.f32 %v281, %v304
    %306 = vdwg.mxu0
    %v307 = vlaneseq
    %v308 = vshrl.u32 %v307, 7
    %v309 = vlaneseq
    %v310 = vand.u32 %v309, 127
    %vm311 = vcmp.le.s32.totalorder %v310, %v308
    %v312 = vsel %vm311, 0.0, -inf
    loop: start=0, step=1, limit=6
    $region126: #{tpu_custom_call.1} parent=1 // loop_pre_header
      _
    $region127: #{tpu_custom_call.1} parent=1 // loop_header
      %s314 = sphi 0, %s318
      %p315 = scmp.ge.s32.totalorder %s314, 6
      %v319 = vphi %v303, %v1588
      %v320 = vphi %v305, %v1589
    $region128: #{tpu_custom_call.1} parent=1 // loop_header_branch
      %317 = sbr.rel (%p315) target = $region132
    $region129: #{tpu_custom_call.1} parent=1 // loop_body
      %v321 = vpack.c.bf16 %v320, %v319
      %s322 = smul.u32 %s314, 48
      %s323 = smul.addr %s322, 4
      %s324 = scalar_lea.vmem [#allocation8], %s323
      %v325 = vld [vmem:[%s324] sm:$0xff]
      %v326 = vld [vmem:[%s324 + $0x8] sm:$0xf]
      %v327 = vld [vmem:[%s324 + $0xc] sm:$0xff]
      %v328 = vld [vmem:[%s324 + $0x14] sm:$0xf]
      %v329 = vld [vmem:[%s324 + $0x18] sm:$0xff]
      %v330 = vld [vmem:[%s324 + $0x20] sm:$0xf]
      %v331 = vld [vmem:[%s324 + $0x24] sm:$0xff]
      %v332 = vld [vmem:[%s324 + $0x2c] sm:$0xf]
      %v333 = vld [vmem:[%s324 + $0x30] sm:$0xff]
      %v334 = vld [vmem:[%s324 + $0x38] sm:$0xf]
      %v335 = vld [vmem:[%s324 + $0x3c] sm:$0xff]
      %v336 = vld [vmem:[%s324 + $0x44] sm:$0xf]
      %v337 = vld [vmem:[%s324 + $0x48] sm:$0xff]
      %v338 = vld [vmem:[%s324 + $0x50] sm:$0xf]
      %v339 = vld [vmem:[%s324 + $0x54] sm:$0xff]
      %v340 = vld [vmem:[%s324 + $0x5c] sm:$0xf]
      %v341 = vld [vmem:[%s324 + $0x60] sm:$0xff]
      %v342 = vld [vmem:[%s324 + $0x68] sm:$0xf]
      %v343 = vld [vmem:[%s324 + $0x6c] sm:$0xff]
      %v344 = vld [vmem:[%s324 + $0x74] sm:$0xf]
      %v345 = vld [vmem:[%s324 + $0x78] sm:$0xff]
      %v346 = vld [vmem:[%s324 + $0x80] sm:$0xf]
      %v347 = vld [vmem:[%s324 + $0x84] sm:$0xff]
      %v348 = vld [vmem:[%s324 + $0x8c] sm:$0xf]
      %v349 = vld [vmem:[%s324 + $0x90] sm:$0xff]
      %v350 = vld [vmem:[%s324 + $0x98] sm:$0xf]
      %v351 = vld [vmem:[%s324 + $0x9c] sm:$0xff]
      %v352 = vld [vmem:[%s324 + $0xa4] sm:$0xf]
      %v353 = vld [vmem:[%s324 + $0xa8] sm:$0xff]
      %v354 = vld [vmem:[%s324 + $0xb0] sm:$0xf]
      %v355 = vld [vmem:[%s324 + $0xb4] sm:$0xff]
      %v356 = vld [vmem:[%s324 + $0xbc] sm:$0xf]
      %s357 = smul.u32 %s314, 3
      %s358 = scalar_lea.vmem [#allocation10], %s357
      %v359 = vld [vmem:[%s358] sm:$0x7]
      %v361 = vperm.slane %v359, 0
      %v362 = vperm.slane %v359, 1
      %v363 = vperm.slane %v359, 2
      %v399 = vunpack.c.l.b16 %v325
      %v400 = vunpack.c.h.b16 %v325
      %v401 = vunpack.c.l.b16 %v326
      %v402 = vunpack.c.l.b16 %v327
      %v403 = vunpack.c.h.b16 %v327
      %v404 = vunpack.c.l.b16 %v328
      %v405 = vunpack.c.l.b16 %v329
      %v406 = vunpack.c.h.b16 %v329
      %v407 = vunpack.c.l.b16 %v330
      %v408 = vunpack.c.l.b16 %v331
      %v409 = vunpack.c.h.b16 %v331
      %v410 = vunpack.c.l.b16 %v332
      %v411 = vunpack.c.l.b16 %v333
      %v412 = vunpack.c.h.b16 %v333
      %v413 = vunpack.c.l.b16 %v334
      %v414 = vunpack.c.l.b16 %v335
      %v415 = vunpack.c.h.b16 %v335
      %v416 = vunpack.c.l.b16 %v336
      %v417 = vunpack.c.l.b16 %v337
      %v418 = vunpack.c.h.b16 %v337
      %v419 = vunpack.c.l.b16 %v338
      %v420 = vunpack.c.l.b16 %v339
      %v421 = vunpack.c.h.b16 %v339
      %v422 = vunpack.c.l.b16 %v340
      %v423 = vunpack.c.l.b16 %v341
      %v424 = vunpack.c.h.b16 %v341
      %v425 = vunpack.c.l.b16 %v342
      %v426 = vunpack.c.l.b16 %v343
      %v427 = vunpack.c.h.b16 %v343
      %v428 = vunpack.c.l.b16 %v344
      %v429 = vunpack.c.l.b16 %v345
      %v430 = vunpack.c.h.b16 %v345
      %v431 = vunpack.c.l.b16 %v346
      %v432 = vunpack.c.l.b16 %v347
      %v433 = vunpack.c.h.b16 %v347
      %v434 = vunpack.c.l.b16 %v348
      %v435 = vunpack.c.l.b16 %v349
      %v436 = vunpack.c.h.b16 %v349
      %v437 = vunpack.c.l.b16 %v350
      %v438 = vunpack.c.l.b16 %v351
      %v439 = vunpack.c.h.b16 %v351
      %v440 = vunpack.c.l.b16 %v352
      %v441 = vunpack.c.l.b16 %v353
      %v442 = vunpack.c.h.b16 %v353
      %v443 = vunpack.c.l.b16 %v354
      %v444 = vunpack.c.l.b16 %v355
      %v445 = vunpack.c.h.b16 %v355
      %v446 = vunpack.c.l.b16 %v356
      %v447 = vpack.c.b16 %v402, %v399
      %v448 = vpack.c.b16 %v403, %v400
      %v449 = vpack.c.b16 %v404, %v401
      %v450 = vpack.c.b16 %v408, %v405
      %v451 = vpack.c.b16 %v409, %v406
      %v452 = vpack.c.b16 %v410, %v407
      %v453 = vpack.c.b16 %v414, %v411
      %v454 = vpack.c.b16 %v415, %v412
      %v455 = vpack.c.b16 %v416, %v413
      %v456 = vpack.c.b16 %v420, %v417
      %v457 = vpack.c.b16 %v421, %v418
      %v458 = vpack.c.b16 %v422, %v419
      %v459 = vpack.c.b16 %v426, %v423
      %v460 = vpack.c.b16 %v427, %v424
      %v461 = vpack.c.b16 %v428, %v425
      %v462 = vpack.c.b16 %v432, %v429
      %v463 = vpack.c.b16 %v433, %v430
      %v464 = vpack.c.b16 %v434, %v431
      %v465 = vpack.c.b16 %v438, %v435
      %v466 = vpack.c.b16 %v439, %v436
      %v467 = vpack.c.b16 %v440, %v437
      %v468 = vpack.c.b16 %v444, %v441
      %v469 = vpack.c.b16 %v445, %v442
      %v470 = vpack.c.b16 %v446, %v443
      %495 = vmatpush.bf16.msra.mxu0 %v468
      %496 = vmatpush.bf16.msra.mxu0 %v465
      %497 = vmatpush.bf16.msra.mxu0 %v462
      %498 = vmatpush.bf16.msra.mxu0 %v459
      %499 = vmatpush.bf16.msra.mxu0 %v456
      %500 = vmatpush.bf16.msra.mxu0 %v453
      %501 = vmatpush.bf16.msra.mxu0 %v450
      %502 = vmatpush.bf16.msra.mxu0 %v447
      %503 = vmatmul.bf16.gmra.mxu0 %v321
      %v504 = vpop.f32.mrf.mxu0
      %v505 = vadd.f32 %v361, %v504
      %v506 = vpop.f32.mrf.mxu0
      %v507 = vadd.f32 %v361, %v506
      %508 = vdwg.mxu0
      %509 = vmatpush.bf16.msra.mxu0 %v469
      %510 = vmatpush.bf16.msra.mxu0 %v466
      %511 = vmatpush.bf16.msra.mxu0 %v463
      %512 = vmatpush.bf16.msra.mxu0 %v460
      %513 = vmatpush.bf16.msra.mxu0 %v457
      %514 = vmatpush.bf16.msra.mxu0 %v454
      %515 = vmatpush.bf16.msra.mxu0 %v451
      %516 = vmatpush.bf16.msra.mxu0 %v448
      %517 = vmatmul.bf16.gmra.mxu0 %v321
      %v518 = vpop.f32.mrf.mxu0
      %v519 = vadd.f32 %v362, %v518
      %v520 = vpop.f32.mrf.mxu0
      %v521 = vadd.f32 %v362, %v520
      %522 = vdwg.mxu0
      %523 = vmatpush.bf16.msra.mxu0 %v470
      %524 = vmatpush.bf16.msra.mxu0 %v467
      %525 = vmatpush.bf16.msra.mxu0 %v464
      %526 = vmatpush.bf16.msra.mxu0 %v461
      %527 = vmatpush.bf16.msra.mxu0 %v458
      %528 = vmatpush.bf16.msra.mxu0 %v455
      %529 = vmatpush.bf16.msra.mxu0 %v452
      %530 = vmatpush.bf16.msra.mxu0 %v449
      %531 = vmatmul.bf16.gmra.mxu0 %v321
      %v532 = vpop.f32.mrf.mxu0
      %v533 = vadd.f32 %v363, %v532
      %v534 = vpop.f32.mrf.mxu0
      %v535 = vadd.f32 %v363, %v534
      %536 = vdwg.mxu0
      %s537 = smul.u32 %s314, 16
      %s538 = smul.addr %s537, 4
      %s539 = scalar_lea.vmem [#allocation11], %s538
      %v540 = vld [vmem:[%s539] sm:$0xf]
      %v541 = vld [vmem:[%s539 + $0x4] sm:$0xf]
      %v542 = vld [vmem:[%s539 + $0x8] sm:$0xf]
      %v543 = vld [vmem:[%s539 + $0xc] sm:$0xf]
      %v544 = vld [vmem:[%s539 + $0x10] sm:$0xf]
      %v545 = vld [vmem:[%s539 + $0x14] sm:$0xf]
      %v546 = vld [vmem:[%s539 + $0x18] sm:$0xf]
      %v547 = vld [vmem:[%s539 + $0x1c] sm:$0xf]
      %v548 = vld [vmem:[%s539 + $0x20] sm:$0xf]
      %v549 = vld [vmem:[%s539 + $0x24] sm:$0xf]
      %v550 = vld [vmem:[%s539 + $0x28] sm:$0xf]
      %v551 = vld [vmem:[%s539 + $0x2c] sm:$0xf]
      %v552 = vld [vmem:[%s539 + $0x30] sm:$0xf]
      %v553 = vld [vmem:[%s539 + $0x34] sm:$0xf]
      %v554 = vld [vmem:[%s539 + $0x38] sm:$0xf]
      %v555 = vld [vmem:[%s539 + $0x3c] sm:$0xf]
      %v556 = vpack.c.bf16 %v505, %v505
      %v557 = vpack.c.bf16 %v507, %v507
      %v558 = vpack.c.bf16 %v519, %v519
      %v559 = vpack.c.bf16 %v521, %v521
      %v560 = vpack.c.bf16 %v533, %v533
      %v561 = vpack.c.bf16 %v535, %v535
      %vm562 = vcmask 261120
      %v564 = vsel %vm562, %v556, 0
      %v567 = vsel %vm562, %v558, 0
      %569 = vmatpush.bf16.xpose.msra.mxu0 0
      %570 = vmatpush.bf16.xpose.msra.mxu0 0
      %571 = vmatpush.bf16.xpose.msra.mxu0 0
      %572 = vmatpush.bf16.xpose.msra.mxu0 0
      %573 = vmatpush.bf16.xpose.msra.mxu0 0
      %574 = vmatpush.bf16.xpose.msra.mxu0 0
      %575 = vmatpush.bf16.xpose.msra.mxu0 0
      %576 = vmatpush.bf16.xpose.msra.mxu0 %v567
      %577 = vmatmul.bf16.gmra.mxu0 %v564
      %v578 = vpop.f32.mrf.mxu0
      %v579 = vadd.f32 0.0, %v578
      %v580 = vpop.f32.mrf.mxu0
      %581 = vdwg.mxu0
      %v583 = vsel %vm562, %v557, 0
      %v586 = vsel %vm562, %v559, 0
      %588 = vmatpush.bf16.xpose.msra.mxu0 0
      %589 = vmatpush.bf16.xpose.msra.mxu0 0
      %590 = vmatpush.bf16.xpose.msra.mxu0 0
      %591 = vmatpush.bf16.xpose.msra.mxu0 0
      %592 = vmatpush.bf16.xpose.msra.mxu0 0
      %593 = vmatpush.bf16.xpose.msra.mxu0 0
      %594 = vmatpush.bf16.xpose.msra.mxu0 0
      %595 = vmatpush.bf16.xpose.msra.mxu0 %v586
      %596 = vmatmul.bf16.gmra.mxu0 %v583
      %v597 = vpop.f32.mrf.mxu0
      %v598 = vadd.f32 0.0, %v597
      %v599 = vpop.f32.mrf.mxu0
      %600 = vdwg.mxu0
      %v601 = vmul.f32 %v579, 0.17677669
      %v602 = vmul.f32 %v598, 0.17677669
      %v603 = vadd.f32 %v601, %v312
      %v604 = vadd.f32 %v602, %v312
      %vm605 = vcmask 64512
      %v606 = vsel %vm605, %v603, -inf
      %607 = vmax.xlane.f32.xlu0 %v606
      %v608 = vpop.xlane.xlu0 %607
      %v609 = vsel %vm605, %v604, -inf
      %610 = vmax.xlane.f32.xlu0 %v609
      %v611 = vpop.xlane.xlu0 %610
      %v612 = vsub.f32 %v603, %v608
      %v613 = vsub.f32 %v604, %v611
      %v614 = vmul.f32 %v612, 1.442695
      %v615 = vpow.pop %v614
      %v616 = vmul.f32 %v613, 1.442695
      %v617 = vpow.pop %v616
      %v618 = vsel %vm605, %v615, 0.0
      %619 = vadd.xlane.f32.xlu0 %v618
      %v620 = vpop.xlane.xlu0 %619
      %v621 = vsel %vm605, %v617, 0.0
      %622 = vadd.xlane.f32.xlu0 %v621
      %v623 = vpop.xlane.xlu0 %622
      %v624 = vrcp.pop %v620
      %v625 = vrcp.pop %v623
      %v626 = vmul.f32 %v615, %v624
      %v627 = vmul.f32 %v617, %v625
      %v628 = vpack.c.bf16 %v626, %v626
      %v629 = vpack.c.bf16 %v627, %v627
      %v631 = vsel %vm605, %v628, 0
      %vm633 = vcmask 1043456
      %v635 = vsel %vm633, %v560, 0
      %637 = vmatpush.bf16.msra.mxu0 0
      %638 = vmatpush.bf16.msra.mxu0 0
      %639 = vmatpush.bf16.msra.mxu0 0
      %640 = vmatpush.bf16.msra.mxu0 0
      %641 = vmatpush.bf16.msra.mxu0 0
      %642 = vmatpush.bf16.msra.mxu0 0
      %643 = vmatpush.bf16.msra.mxu0 0
      %644 = vmatpush.bf16.msra.mxu0 %v635
      %645 = vmatmul.bf16.gmra.mxu0 %v631
      %v646 = vpop.f32.mrf.mxu0
      %v647 = vadd.f32 0.0, %v646
      %v648 = vpop.f32.mrf.mxu0
      %649 = vdwg.mxu0
      %v651 = vsel %vm605, %v629, 0
      %v654 = vsel %vm633, %v561, 0
      %656 = vmatpush.bf16.msra.mxu0 0
      %657 = vmatpush.bf16.msra.mxu0 0
      %658 = vmatpush.bf16.msra.mxu0 0
      %659 = vmatpush.bf16.msra.mxu0 0
      %660 = vmatpush.bf16.msra.mxu0 0
      %661 = vmatpush.bf16.msra.mxu0 0
      %662 = vmatpush.bf16.msra.mxu0 0
      %663 = vmatpush.bf16.msra.mxu0 %v654
      %664 = vmatmul.bf16.gmra.mxu0 %v651
      %v665 = vpop.f32.mrf.mxu0
      %v666 = vadd.f32 0.0, %v665
      %v667 = vpop.f32.mrf.mxu0
      %668 = vdwg.mxu0
      %v669 = vpack.c.bf16 %v666, %v647
      %v671 = vunpack.c.l.b16 %v556
      %v672 = vpack.c.b16 %v671, %v671
      %673 = vrot.lane.b32.xlu0 %v672, 96
      %v674 = vpop.permute.xlu0 %673
      %v676 = vunpack.c.l.b16 %v558
      %v677 = vpack.c.b16 %v676, %v676
      %678 = vrot.lane.b32.xlu0 %v677, 96
      %v679 = vpop.permute.xlu0 %678
      %v681 = vsel %vm562, %v674, 0
      %v684 = vsel %vm562, %v679, 0
      %686 = vmatpush.bf16.xpose.msra.mxu0 0
      %687 = vmatpush.bf16.xpose.msra.mxu0 0
      %688 = vmatpush.bf16.xpose.msra.mxu0 0
      %689 = vmatpush.bf16.xpose.msra.mxu0 0
      %690 = vmatpush.bf16.xpose.msra.mxu0 0
      %691 = vmatpush.bf16.xpose.msra.mxu0 0
      %692 = vmatpush.bf16.xpose.msra.mxu0 0
      %693 = vmatpush.bf16.xpose.msra.mxu0 %v684
      %694 = vmatmul.bf16.gmra.mxu0 %v681
      %v695 = vpop.f32.mrf.mxu0
      %v696 = vadd.f32 0.0, %v695
      %v697 = vpop.f32.mrf.mxu0
      %698 = vdwg.mxu0
      %v700 = vunpack.c.l.b16 %v557
      %v701 = vpack.c.b16 %v700, %v700
      %702 = vrot.lane.b32.xlu0 %v701, 96
      %v703 = vpop.permute.xlu0 %702
      %v705 = vunpack.c.l.b16 %v559
      %v706 = vpack.c.b16 %v705, %v705
      %707 = vrot.lane.b32.xlu0 %v706, 96
      %v708 = vpop.permute.xlu0 %707
      %v710 = vsel %vm562, %v703, 0
      %v713 = vsel %vm562, %v708, 0
      %715 = vmatpush.bf16.xpose.msra.mxu0 0
      %716 = vmatpush.bf16.xpose.msra.mxu0 0
      %717 = vmatpush.bf16.xpose.msra.mxu0 0
      %718 = vmatpush.bf16.xpose.msra.mxu0 0
      %719 = vmatpush.bf16.xpose.msra.mxu0 0
      %720 = vmatpush.bf16.xpose.msra.mxu0 0
      %721 = vmatpush.bf16.xpose.msra.mxu0 0
      %722 = vmatpush.bf16.xpose.msra.mxu0 %v713
      %723 = vmatmul.bf16.gmra.mxu0 %v710
      %v724 = vpop.f32.mrf.mxu0
      %v725 = vadd.f32 0.0, %v724
      %v726 = vpop.f32.mrf.mxu0
      %727 = vdwg.mxu0
      %v728 = vmul.f32 %v696, 0.17677669
      %v729 = vmul.f32 %v725, 0.17677669
      %v730 = vadd.f32 %v728, %v312
      %v731 = vadd.f32 %v729, %v312
      %v732 = vsel %vm605, %v730, -inf
      %733 = vmax.xlane.f32.xlu0 %v732
      %v734 = vpop.xlane.xlu0 %733
      %v735 = vsel %vm605, %v731, -inf
      %736 = vmax.xlane.f32.xlu0 %v735
      %v737 = vpop.xlane.xlu0 %736
      %v738 = vsub.f32 %v730, %v734
      %v739 = vsub.f32 %v731, %v737
      %v740 = vmul.f32 %v738, 1.442695
      %v741 = vpow.pop %v740
      %v742 = vmul.f32 %v739, 1.442695
      %v743 = vpow.pop %v742
      %v744 = vsel %vm605, %v741, 0.0
      %745 = vadd.xlane.f32.xlu0 %v744
      %v746 = vpop.xlane.xlu0 %745
      %v747 = vsel %vm605, %v743, 0.0
      %748 = vadd.xlane.f32.xlu0 %v747
      %v749 = vpop.xlane.xlu0 %748
      %v750 = vrcp.pop %v746
      %v751 = vrcp.pop %v749
      %v752 = vmul.f32 %v741, %v750
      %v753 = vmul.f32 %v743, %v751
      %v754 = vpack.c.bf16 %v752, %v752
      %v755 = vpack.c.bf16 %v753, %v753
      %v757 = vunpack.c.l.b16 %v560
      %v758 = vpack.c.b16 %v757, %v757
      %759 = vrot.lane.b32.xlu0 %v758, 96
      %v760 = vpop.permute.xlu0 %759
      %v762 = vsel %vm605, %v754, 0
      %v765 = vsel %vm633, %v760, 0
      %767 = vmatpush.bf16.msra.mxu0 0
      %768 = vmatpush.bf16.msra.mxu0 0
      %769 = vmatpush.bf16.msra.mxu0 0
      %770 = vmatpush.bf16.msra.mxu0 0
      %771 = vmatpush.bf16.msra.mxu0 0
      %772 = vmatpush.bf16.msra.mxu0 0
      %773 = vmatpush.bf16.msra.mxu0 0
      %774 = vmatpush.bf16.msra.mxu0 %v765
      %775 = vmatmul.bf16.gmra.mxu0 %v762
      %v776 = vpop.f32.mrf.mxu0
      %v777 = vadd.f32 0.0, %v776
      %v778 = vpop.f32.mrf.mxu0
      %779 = vdwg.mxu0
      %v781 = vunpack.c.l.b16 %v561
      %v782 = vpack.c.b16 %v781, %v781
      %783 = vrot.lane.b32.xlu0 %v782, 96
      %v784 = vpop.permute.xlu0 %783
      %v786 = vsel %vm605, %v755, 0
      %v789 = vsel %vm633, %v784, 0
      %791 = vmatpush.bf16.msra.mxu0 0
      %792 = vmatpush.bf16.msra.mxu0 0
      %793 = vmatpush.bf16.msra.mxu0 0
      %794 = vmatpush.bf16.msra.mxu0 0
      %795 = vmatpush.bf16.msra.mxu0 0
      %796 = vmatpush.bf16.msra.mxu0 0
      %797 = vmatpush.bf16.msra.mxu0 0
      %798 = vmatpush.bf16.msra.mxu0 %v789
      %799 = vmatmul.bf16.gmra.mxu0 %v786
      %v800 = vpop.f32.mrf.mxu0
      %v801 = vadd.f32 0.0, %v800
      %v802 = vpop.f32.mrf.mxu0
      %803 = vdwg.mxu0
      %v804 = vpack.c.bf16 %v801, %v777
      %v809 = vunpack.c.l.b16 %v544
      %v810 = vunpack.c.l.b16 %v545
      %v811 = vunpack.c.l.b16 %v546
      %v812 = vunpack.c.l.b16 %v547
      %v813 = vpack.c.b16 %v810, %v809
      %v814 = vpack.c.b16 %v812, %v811
      %v818 = vsel %vm562, %v804, 0
      %820 = vmatpush.bf16.msra.mxu0 0
      %821 = vmatpush.bf16.msra.mxu0 0
      %822 = vmatpush.bf16.msra.mxu0 0
      %823 = vmatpush.bf16.msra.mxu0 0
      %824 = vmatpush.bf16.msra.mxu0 0
      %825 = vmatpush.bf16.msra.mxu0 0
      %826 = vmatpush.bf16.msra.mxu0 %v814
      %827 = vmatpush.bf16.msra.mxu0 %v813
      %828 = vmatmul.bf16.gmra.mxu0 %v818
      %v829 = vpop.f32.mrf.mxu0
      %v830 = vadd.f32 0.0, %v829
      %v831 = vpop.f32.mrf.mxu0
      %v832 = vadd.f32 0.0, %v831
      %833 = vdwg.mxu0
      %v838 = vunpack.c.l.b16 %v540
      %v839 = vunpack.c.l.b16 %v541
      %v840 = vunpack.c.l.b16 %v542
      %v841 = vunpack.c.l.b16 %v543
      %v842 = vpack.c.b16 %v839, %v838
      %v843 = vpack.c.b16 %v841, %v840
      %v847 = vsel %vm562, %v669, 0
      %849 = vmatpush.bf16.msra.mxu0 0
      %850 = vmatpush.bf16.msra.mxu0 0
      %851 = vmatpush.bf16.msra.mxu0 0
      %852 = vmatpush.bf16.msra.mxu0 0
      %853 = vmatpush.bf16.msra.mxu0 0
      %854 = vmatpush.bf16.msra.mxu0 0
      %855 = vmatpush.bf16.msra.mxu0 %v843
      %856 = vmatpush.bf16.msra.mxu0 %v842
      %857 = vmatmul.bf16.gmra.mxu0 %v847
      %v858 = vpop.f32.mrf.mxu0
      %v859 = vadd.f32 %v830, %v858
      %v860 = vpop.f32.mrf.mxu0
      %v861 = vadd.f32 %v832, %v860
      %862 = vdwg.mxu0
      %863 = vrot.lane.b32.xlu0 %v672, 64
      %v864 = vpop.permute.xlu0 %863
      %865 = vrot.lane.b32.xlu0 %v677, 64
      %v866 = vpop.permute.xlu0 %865
      %v868 = vsel %vm562, %v864, 0
      %v871 = vsel %vm562, %v866, 0
      %873 = vmatpush.bf16.xpose.msra.mxu0 0
      %874 = vmatpush.bf16.xpose.msra.mxu0 0
      %875 = vmatpush.bf16.xpose.msra.mxu0 0
      %876 = vmatpush.bf16.xpose.msra.mxu0 0
      %877 = vmatpush.bf16.xpose.msra.mxu0 0
      %878 = vmatpush.bf16.xpose.msra.mxu0 0
      %879 = vmatpush.bf16.xpose.msra.mxu0 0
      %880 = vmatpush.bf16.xpose.msra.mxu0 %v871
      %881 = vmatmul.bf16.gmra.mxu0 %v868
      %v882 = vpop.f32.mrf.mxu0
      %v883 = vadd.f32 0.0, %v882
      %v884 = vpop.f32.mrf.mxu0
      %885 = vdwg.mxu0
      %886 = vrot.lane.b32.xlu0 %v701, 64
      %v887 = vpop.permute.xlu0 %886
      %888 = vrot.lane.b32.xlu0 %v706, 64
      %v889 = vpop.permute.xlu0 %888
      %v891 = vsel %vm562, %v887, 0
      %v894 = vsel %vm562, %v889, 0
      %896 = vmatpush.bf16.xpose.msra.mxu0 0
      %897 = vmatpush.bf16.xpose.msra.mxu0 0
      %898 = vmatpush.bf16.xpose.msra.mxu0 0
      %899 = vmatpush.bf16.xpose.msra.mxu0 0
      %900 = vmatpush.bf16.xpose.msra.mxu0 0
      %901 = vmatpush.bf16.xpose.msra.mxu0 0
      %902 = vmatpush.bf16.xpose.msra.mxu0 0
      %903 = vmatpush.bf16.xpose.msra.mxu0 %v894
      %904 = vmatmul.bf16.gmra.mxu0 %v891
      %v905 = vpop.f32.mrf.mxu0
      %v906 = vadd.f32 0.0, %v905
      %v907 = vpop.f32.mrf.mxu0
      %908 = vdwg.mxu0
      %v909 = vmul.f32 %v883, 0.17677669
      %v910 = vmul.f32 %v906, 0.17677669
      %v911 = vadd.f32 %v909, %v312
      %v912 = vadd.f32 %v910, %v312
      %v913 = vsel %vm605, %v911, -inf
      %914 = vmax.xlane.f32.xlu0 %v913
      %v915 = vpop.xlane.xlu0 %914
      %v916 = vsel %vm605, %v912, -inf
      %917 = vmax.xlane.f32.xlu0 %v916
      %v918 = vpop.xlane.xlu0 %917
      %v919 = vsub.f32 %v911, %v915
      %v920 = vsub.f32 %v912, %v918
      %v921 = vmul.f32 %v919, 1.442695
      %v922 = vpow.pop %v921
      %v923 = vmul.f32 %v920, 1.442695
      %v924 = vpow.pop %v923
      %v925 = vsel %vm605, %v922, 0.0
      %926 = vadd.xlane.f32.xlu0 %v925
      %v927 = vpop.xlane.xlu0 %926
      %v928 = vsel %vm605, %v924, 0.0
      %929 = vadd.xlane.f32.xlu0 %v928
      %v930 = vpop.xlane.xlu0 %929
      %v931 = vrcp.pop %v927
      %v932 = vrcp.pop %v930
      %v933 = vmul.f32 %v922, %v931
      %v934 = vmul.f32 %v924, %v932
      %v935 = vpack.c.bf16 %v933, %v933
      %v936 = vpack.c.bf16 %v934, %v934
      %937 = vrot.lane.b32.xlu0 %v758, 64
      %v938 = vpop.permute.xlu0 %937
      %v940 = vsel %vm605, %v935, 0
      %v943 = vsel %vm633, %v938, 0
      %945 = vmatpush.bf16.msra.mxu0 0
      %946 = vmatpush.bf16.msra.mxu0 0
      %947 = vmatpush.bf16.msra.mxu0 0
      %948 = vmatpush.bf16.msra.mxu0 0
      %949 = vmatpush.bf16.msra.mxu0 0
      %950 = vmatpush.bf16.msra.mxu0 0
      %951 = vmatpush.bf16.msra.mxu0 0
      %952 = vmatpush.bf16.msra.mxu0 %v943
      %953 = vmatmul.bf16.gmra.mxu0 %v940
      %v954 = vpop.f32.mrf.mxu0
      %v955 = vadd.f32 0.0, %v954
      %v956 = vpop.f32.mrf.mxu0
      %957 = vdwg.mxu0
      %958 = vrot.lane.b32.xlu0 %v782, 64
      %v959 = vpop.permute.xlu0 %958
      %v961 = vsel %vm605, %v936, 0
      %v964 = vsel %vm633, %v959, 0
      %966 = vmatpush.bf16.msra.mxu0 0
      %967 = vmatpush.bf16.msra.mxu0 0
      %968 = vmatpush.bf16.msra.mxu0 0
      %969 = vmatpush.bf16.msra.mxu0 0
      %970 = vmatpush.bf16.msra.mxu0 0
      %971 = vmatpush.bf16.msra.mxu0 0
      %972 = vmatpush.bf16.msra.mxu0 0
      %973 = vmatpush.bf16.msra.mxu0 %v964
      %974 = vmatmul.bf16.gmra.mxu0 %v961
      %v975 = vpop.f32.mrf.mxu0
      %v976 = vadd.f32 0.0, %v975
      %v977 = vpop.f32.mrf.mxu0
      %978 = vdwg.mxu0
      %v979 = vpack.c.bf16 %v976, %v955
      %v984 = vunpack.c.l.b16 %v548
      %v985 = vunpack.c.l.b16 %v549
      %v986 = vunpack.c.l.b16 %v550
      %v987 = vunpack.c.l.b16 %v551
      %v988 = vpack.c.b16 %v985, %v984
      %v989 = vpack.c.b16 %v987, %v986
      %v993 = vsel %vm562, %v979, 0
      %995 = vmatpush.bf16.msra.mxu0 0
      %996 = vmatpush.bf16.msra.mxu0 0
      %997 = vmatpush.bf16.msra.mxu0 0
      %998 = vmatpush.bf16.msra.mxu0 0
      %999 = vmatpush.bf16.msra.mxu0 0
      %1000 = vmatpush.bf16.msra.mxu0 0
      %1001 = vmatpush.bf16.msra.mxu0 %v989
      %1002 = vmatpush.bf16.msra.mxu0 %v988
      %1003 = vmatmul.bf16.gmra.mxu0 %v993
      %v1004 = vpop.f32.mrf.mxu0
      %v1005 = vadd.f32 0.0, %v1004
      %v1006 = vpop.f32.mrf.mxu0
      %v1007 = vadd.f32 0.0, %v1006
      %1008 = vdwg.mxu0
      %v1009 = vadd.f32 %v859, %v1005
      %v1010 = vadd.f32 %v861, %v1007
      %1011 = vrot.lane.b32.xlu0 %v672, 32
      %v1012 = vpop.permute.xlu0 %1011
      %1013 = vrot.lane.b32.xlu0 %v677, 32
      %v1014 = vpop.permute.xlu0 %1013
      %v1016 = vsel %vm562, %v1012, 0
      %v1019 = vsel %vm562, %v1014, 0
      %1021 = vmatpush.bf16.xpose.msra.mxu0 0
      %1022 = vmatpush.bf16.xpose.msra.mxu0 0
      %1023 = vmatpush.bf16.xpose.msra.mxu0 0
      %1024 = vmatpush.bf16.xpose.msra.mxu0 0
      %1025 = vmatpush.bf16.xpose.msra.mxu0 0
      %1026 = vmatpush.bf16.xpose.msra.mxu0 0
      %1027 = vmatpush.bf16.xpose.msra.mxu0 0
      %1028 = vmatpush.bf16.xpose.msra.mxu0 %v1019
      %1029 = vmatmul.bf16.gmra.mxu0 %v1016
      %v1030 = vpop.f32.mrf.mxu0
      %v1031 = vadd.f32 0.0, %v1030
      %v1032 = vpop.f32.mrf.mxu0
      %1033 = vdwg.mxu0
      %1034 = vrot.lane.b32.xlu0 %v701, 32
      %v1035 = vpop.permute.xlu0 %1034
      %1036 = vrot.lane.b32.xlu0 %v706, 32
      %v1037 = vpop.permute.xlu0 %1036
      %v1039 = vsel %vm562, %v1035, 0
      %v1042 = vsel %vm562, %v1037, 0
      %1044 = vmatpush.bf16.xpose.msra.mxu0 0
      %1045 = vmatpush.bf16.xpose.msra.mxu0 0
      %1046 = vmatpush.bf16.xpose.msra.mxu0 0
      %1047 = vmatpush.bf16.xpose.msra.mxu0 0
      %1048 = vmatpush.bf16.xpose.msra.mxu0 0
      %1049 = vmatpush.bf16.xpose.msra.mxu0 0
      %1050 = vmatpush.bf16.xpose.msra.mxu0 0
      %1051 = vmatpush.bf16.xpose.msra.mxu0 %v1042
      %1052 = vmatmul.bf16.gmra.mxu0 %v1039
      %v1053 = vpop.f32.mrf.mxu0
      %v1054 = vadd.f32 0.0, %v1053
      %v1055 = vpop.f32.mrf.mxu0
      %1056 = vdwg.mxu0
      %v1057 = vmul.f32 %v1031, 0.17677669
      %v1058 = vmul.f32 %v1054, 0.17677669
      %v1059 = vadd.f32 %v1057, %v312
      %v1060 = vadd.f32 %v1058, %v312
      %v1061 = vsel %vm605, %v1059, -inf
      %1062 = vmax.xlane.f32.xlu0 %v1061
      %v1063 = vpop.xlane.xlu0 %1062
      %v1064 = vsel %vm605, %v1060, -inf
      %1065 = vmax.xlane.f32.xlu0 %v1064
      %v1066 = vpop.xlane.xlu0 %1065
      %v1067 = vsub.f32 %v1059, %v1063
      %v1068 = vsub.f32 %v1060, %v1066
      %v1069 = vmul.f32 %v1067, 1.442695
      %v1070 = vpow.pop %v1069
      %v1071 = vmul.f32 %v1068, 1.442695
      %v1072 = vpow.pop %v1071
      %v1073 = vsel %vm605, %v1070, 0.0
      %1074 = vadd.xlane.f32.xlu0 %v1073
      %v1075 = vpop.xlane.xlu0 %1074
      %v1076 = vsel %vm605, %v1072, 0.0
      %1077 = vadd.xlane.f32.xlu0 %v1076
      %v1078 = vpop.xlane.xlu0 %1077
      %v1079 = vrcp.pop %v1075
      %v1080 = vrcp.pop %v1078
      %v1081 = vmul.f32 %v1070, %v1079
      %v1082 = vmul.f32 %v1072, %v1080
      %v1083 = vpack.c.bf16 %v1081, %v1081
      %v1084 = vpack.c.bf16 %v1082, %v1082
      %1085 = vrot.lane.b32.xlu0 %v758, 32
      %v1086 = vpop.permute.xlu0 %1085
      %v1088 = vsel %vm605, %v1083, 0
      %v1091 = vsel %vm633, %v1086, 0
      %1093 = vmatpush.bf16.msra.mxu0 0
      %1094 = vmatpush.bf16.msra.mxu0 0
      %1095 = vmatpush.bf16.msra.mxu0 0
      %1096 = vmatpush.bf16.msra.mxu0 0
      %1097 = vmatpush.bf16.msra.mxu0 0
      %1098 = vmatpush.bf16.msra.mxu0 0
      %1099 = vmatpush.bf16.msra.mxu0 0
      %1100 = vmatpush.bf16.msra.mxu0 %v1091
      %1101 = vmatmul.bf16.gmra.mxu0 %v1088
      %v1102 = vpop.f32.mrf.mxu0
      %v1103 = vadd.f32 0.0, %v1102
      %v1104 = vpop.f32.mrf.mxu0
      %1105 = vdwg.mxu0
      %1106 = vrot.lane.b32.xlu0 %v782, 32
      %v1107 = vpop.permute.xlu0 %1106
      %v1109 = vsel %vm605, %v1084, 0
      %v1112 = vsel %vm633, %v1107, 0
      %1114 = vmatpush.bf16.msra.mxu0 0
      %1115 = vmatpush.bf16.msra.mxu0 0
      %1116 = vmatpush.bf16.msra.mxu0 0
      %1117 = vmatpush.bf16.msra.mxu0 0
      %1118 = vmatpush.bf16.msra.mxu0 0
      %1119 = vmatpush.bf16.msra.mxu0 0
      %1120 = vmatpush.bf16.msra.mxu0 0
      %1121 = vmatpush.bf16.msra.mxu0 %v1112
      %1122 = vmatmul.bf16.gmra.mxu0 %v1109
      %v1123 = vpop.f32.mrf.mxu0
      %v1124 = vadd.f32 0.0, %v1123
      %v1125 = vpop.f32.mrf.mxu0
      %1126 = vdwg.mxu0
      %v1127 = vpack.c.bf16 %v1124, %v1103
      %v1132 = vunpack.c.l.b16 %v552
      %v1133 = vunpack.c.l.b16 %v553
      %v1134 = vunpack.c.l.b16 %v554
      %v1135 = vunpack.c.l.b16 %v555
      %v1136 = vpack.c.b16 %v1133, %v1132
      %v1137 = vpack.c.b16 %v1135, %v1134
      %v1141 = vsel %vm562, %v1127, 0
      %1143 = vmatpush.bf16.msra.mxu0 0
      %1144 = vmatpush.bf16.msra.mxu0 0
      %1145 = vmatpush.bf16.msra.mxu0 0
      %1146 = vmatpush.bf16.msra.mxu0 0
      %1147 = vmatpush.bf16.msra.mxu0 0
      %1148 = vmatpush.bf16.msra.mxu0 0
      %1149 = vmatpush.bf16.msra.mxu0 %v1137
      %1150 = vmatpush.bf16.msra.mxu0 %v1136
      %1151 = vmatmul.bf16.gmra.mxu0 %v1141
      %v1152 = vpop.f32.mrf.mxu0
      %v1153 = vadd.f32 0.0, %v1152
      %v1154 = vpop.f32.mrf.mxu0
      %v1155 = vadd.f32 0.0, %v1154
      %1156 = vdwg.mxu0
      %v1157 = vadd.f32 %v1009, %v1153
      %v1158 = vadd.f32 %v1010, %v1155
      %s1159 = scalar_lea.vmem [#allocation13], %s314
      %v1160 = vld [vmem:[%s1159] sm:$0x1]
      %v1162 = vperm.slane %v1160, 0
      %v1164 = vadd.f32 %v1157, %v1162
      %v1165 = vadd.f32 %v1158, %v1162
      %v1166 = vadd.f32 %v319, %v1164
      %v1167 = vadd.f32 %v320, %v1165
      %s1168 = scalar_lea.vmem %s7, %s314
      %v1169 = vld [vmem:[%s1168] sm:$0x1]
      %s1170 = scalar_lea.vmem [#allocation14], %s314
      %v1171 = vld [vmem:[%s1170] sm:$0x1]
      %1172 = vadd.xlane.f32.xlu0 %v1166
      %v1173 = vpop.xlane.xlu0 %1172
      %1174 = vadd.xlane.f32.xlu0 %v1167
      %v1175 = vpop.xlane.xlu0 %1174
      %v1176 = vrcp.pop 128.0
      %v1177 = vmul.f32 128.0, %v1176
      %v1178 = vsub.f32 1.0, %v1177
      %v1179 = vmul.f32 %v1176, %v1178
      %v1180 = vadd.f32 %v1176, %v1179
      %vm1181 = vweird.f32 %v1176
      %v1182 = vsel %vm1181, %v1176, %v1180
      %v1183 = vmul.f32 %v1173, %v1182
      %v1184 = vmul.f32 %v1175, %v1182
      %v1185 = vsub.f32 %v1166, %v1183
      %v1186 = vsub.f32 %v1167, %v1184
      %v1187 = vmul.f32 %v1185, %v1185
      %v1188 = vmul.f32 %v1186, %v1186
      %1189 = vadd.xlane.f32.xlu0 %v1187
      %v1190 = vpop.xlane.xlu0 %1189
      %1191 = vadd.xlane.f32.xlu0 %v1188
      %v1192 = vpop.xlane.xlu0 %1191
      %v1193 = vmul.f32 %v1190, %v1182
      %v1194 = vmul.f32 %v1192, %v1182
      %v1195 = vadd.f32 %v1193, 1e-05
      %v1196 = vadd.f32 %v1194, 1e-05
      %v1197 = vrsqrt.pop %v1195
      %v1198 = vmul.f32 %v1197, %v1195
      %v1199 = vmul.f32 %v1198, %v1197
      %v1200 = vmul.f32 0.5, %v1199
      %v1201 = vsub.f32 1.5, %v1200
      %v1202 = vmul.f32 %v1197, %v1201
      %vm1203 = vweird.f32 %v1195
      %vm1204 = vweird.f32 %v1197
      %vm1205 = vmor %vm1203, %vm1204
      %v1206 = vsel %vm1205, %v1197, %v1202
      %v1207 = vrsqrt.pop %v1196
      %v1208 = vmul.f32 %v1207, %v1196
      %v1209 = vmul.f32 %v1208, %v1207
      %v1210 = vmul.f32 0.5, %v1209
      %v1211 = vsub.f32 1.5, %v1210
      %v1212 = vmul.f32 %v1207, %v1211
      %vm1213 = vweird.f32 %v1196
      %vm1214 = vweird.f32 %v1207
      %vm1215 = vmor %vm1213, %vm1214
      %v1216 = vsel %vm1215, %v1207, %v1212
      %v1217 = vmul.f32 %v1185, %v1206
      %v1218 = vmul.f32 %v1186, %v1216
      %v1220 = vperm.slane %v1169, 0
      %v1222 = vmul.f32 %v1217, %v1220
      %v1223 = vmul.f32 %v1218, %v1220
      %v1225 = vperm.slane %v1171, 0
      %v1227 = vadd.f32 %v1222, %v1225
      %v1228 = vadd.f32 %v1223, %v1225
      %v1229 = vpack.c.bf16 %v1228, %v1227
      %s1230 = smul.u32 %s314, 32
      %s1231 = smul.addr %s1230, 4
      %s1232 = scalar_lea.vmem [#allocation16], %s1231
      %v1233 = vld [vmem:[%s1232] sm:$0xff]
      %v1234 = vld [vmem:[%s1232 + $0x8] sm:$0xff]
      %v1235 = vld [vmem:[%s1232 + $0x10] sm:$0xff]
      %v1236 = vld [vmem:[%s1232 + $0x18] sm:$0xff]
      %v1237 = vld [vmem:[%s1232 + $0x20] sm:$0xff]
      %v1238 = vld [vmem:[%s1232 + $0x28] sm:$0xff]
      %v1239 = vld [vmem:[%s1232 + $0x30] sm:$0xff]
      %v1240 = vld [vmem:[%s1232 + $0x38] sm:$0xff]
      %v1241 = vld [vmem:[%s1232 + $0x40] sm:$0xff]
      %v1242 = vld [vmem:[%s1232 + $0x48] sm:$0xff]
      %v1243 = vld [vmem:[%s1232 + $0x50] sm:$0xff]
      %v1244 = vld [vmem:[%s1232 + $0x58] sm:$0xff]
      %v1245 = vld [vmem:[%s1232 + $0x60] sm:$0xff]
      %v1246 = vld [vmem:[%s1232 + $0x68] sm:$0xff]
      %v1247 = vld [vmem:[%s1232 + $0x70] sm:$0xff]
      %v1248 = vld [vmem:[%s1232 + $0x78] sm:$0xff]
      %s1249 = smul.u32 %s314, 2
      %s1250 = scalar_lea.vmem [#allocation17], %s1249
      %v1251 = vld [vmem:[%s1250] sm:$0x3]
      %v1253 = vperm.slane %v1251, 0
      %v1254 = vperm.slane %v1251, 1
      %v1273 = vunpack.c.l.b16 %v1233
      %v1274 = vunpack.c.h.b16 %v1233
      %v1275 = vunpack.c.l.b16 %v1234
      %v1276 = vunpack.c.h.b16 %v1234
      %v1277 = vunpack.c.l.b16 %v1235
      %v1278 = vunpack.c.h.b16 %v1235
      %v1279 = vunpack.c.l.b16 %v1236
      %v1280 = vunpack.c.h.b16 %v1236
      %v1281 = vunpack.c.l.b16 %v1237
      %v1282 = vunpack.c.h.b16 %v1237
      %v1283 = vunpack.c.l.b16 %v1238
      %v1284 = vunpack.c.h.b16 %v1238
      %v1285 = vunpack.c.l.b16 %v1239
      %v1286 = vunpack.c.h.b16 %v1239
      %v1287 = vunpack.c.l.b16 %v1240
      %v1288 = vunpack.c.h.b16 %v1240
      %v1289 = vunpack.c.l.b16 %v1241
      %v1290 = vunpack.c.h.b16 %v1241
      %v1291 = vunpack.c.l.b16 %v1242
      %v1292 = vunpack.c.h.b16 %v1242
      %v1293 = vunpack.c.l.b16 %v1243
      %v1294 = vunpack.c.h.b16 %v1243
      %v1295 = vunpack.c.l.b16 %v1244
      %v1296 = vunpack.c.h.b16 %v1244
      %v1297 = vunpack.c.l.b16 %v1245
      %v1298 = vunpack.c.h.b16 %v1245
      %v1299 = vunpack.c.l.b16 %v1246
      %v1300 = vunpack.c.h.b16 %v1246
      %v1301 = vunpack.c.l.b16 %v1247
      %v1302 = vunpack.c.h.b16 %v1247
      %v1303 = vunpack.c.l.b16 %v1248
      %v1304 = vunpack.c.h.b16 %v1248
      %v1305 = vpack.c.b16 %v1275, %v1273
      %v1306 = vpack.c.b16 %v1276, %v1274
      %v1307 = vpack.c.b16 %v1279, %v1277
      %v1308 = vpack.c.b16 %v1280, %v1278
      %v1309 = vpack.c.b16 %v1283, %v1281
      %v1310 = vpack.c.b16 %v1284, %v1282
      %v1311 = vpack.c.b16 %v1287, %v1285
      %v1312 = vpack.c.b16 %v1288, %v1286
      %v1313 = vpack.c.b16 %v1291, %v1289
      %v1314 = vpack.c.b16 %v1292, %v1290
      %v1315 = vpack.c.b16 %v1295, %v1293
      %v1316 = vpack.c.b16 %v1296, %v1294
      %v1317 = vpack.c.b16 %v1299, %v1297
      %v1318 = vpack.c.b16 %v1300, %v1298
      %v1319 = vpack.c.b16 %v1303, %v1301
      %v1320 = vpack.c.b16 %v1304, %v1302
      %1337 = vmatpush.bf16.msra.mxu0 %v1319
      %1338 = vmatpush.bf16.msra.mxu0 %v1317
      %1339 = vmatpush.bf16.msra.mxu0 %v1315
      %1340 = vmatpush.bf16.msra.mxu0 %v1313
      %1341 = vmatpush.bf16.msra.mxu0 %v1311
      %1342 = vmatpush.bf16.msra.mxu0 %v1309
      %1343 = vmatpush.bf16.msra.mxu0 %v1307
      %1344 = vmatpush.bf16.msra.mxu0 %v1305
      %1345 = vmatmul.bf16.gmra.mxu0 %v1229
      %v1346 = vpop.f32.mrf.mxu0
      %v1347 = vadd.f32 %v1253, %v1346
      %v1348 = vpop.f32.mrf.mxu0
      %v1349 = vadd.f32 %v1253, %v1348
      %1350 = vdwg.mxu0
      %1351 = vmatpush.bf16.msra.mxu0 %v1320
      %1352 = vmatpush.bf16.msra.mxu0 %v1318
      %1353 = vmatpush.bf16.msra.mxu0 %v1316
      %1354 = vmatpush.bf16.msra.mxu0 %v1314
      %1355 = vmatpush.bf16.msra.mxu0 %v1312
      %1356 = vmatpush.bf16.msra.mxu0 %v1310
      %1357 = vmatpush.bf16.msra.mxu0 %v1308
      %1358 = vmatpush.bf16.msra.mxu0 %v1306
      %1359 = vmatmul.bf16.gmra.mxu0 %v1229
      %v1360 = vpop.f32.mrf.mxu0
      %v1361 = vadd.f32 %v1254, %v1360
      %v1362 = vpop.f32.mrf.mxu0
      %v1363 = vadd.f32 %v1254, %v1362
      %1364 = vdwg.mxu0
      %v1365 = vmax.f32 %v1347, 0.0
      %v1366 = vmax.f32 %v1361, 0.0
      %v1367 = vmax.f32 %v1349, 0.0
      %v1368 = vmax.f32 %v1363, 0.0
      %v1369 = vpack.c.bf16 %v1367, %v1365
      %v1370 = vpack.c.bf16 %v1368, %v1366
      %s1371 = smul.addr %s1230, 4
      %s1372 = scalar_lea.vmem [#allocation19], %s1371
      %v1373 = vld [vmem:[%s1372] sm:$0xf]
      %v1374 = vld [vmem:[%s1372 + $0x4] sm:$0xf]
      %v1375 = vld [vmem:[%s1372 + $0x8] sm:$0xf]
      %v1376 = vld [vmem:[%s1372 + $0xc] sm:$0xf]
      %v1377 = vld [vmem:[%s1372 + $0x10] sm:$0xf]
      %v1378 = vld [vmem:[%s1372 + $0x14] sm:$0xf]
      %v1379 = vld [vmem:[%s1372 + $0x18] sm:$0xf]
      %v1380 = vld [vmem:[%s1372 + $0x1c] sm:$0xf]
      %v1381 = vld [vmem:[%s1372 + $0x20] sm:$0xf]
      %v1382 = vld [vmem:[%s1372 + $0x24] sm:$0xf]
      %v1383 = vld [vmem:[%s1372 + $0x28] sm:$0xf]
      %v1384 = vld [vmem:[%s1372 + $0x2c] sm:$0xf]
      %v1385 = vld [vmem:[%s1372 + $0x30] sm:$0xf]
      %v1386 = vld [vmem:[%s1372 + $0x34] sm:$0xf]
      %v1387 = vld [vmem:[%s1372 + $0x38] sm:$0xf]
      %v1388 = vld [vmem:[%s1372 + $0x3c] sm:$0xf]
      %v1389 = vld [vmem:[%s1372 + $0x40] sm:$0xf]
      %v1390 = vld [vmem:[%s1372 + $0x44] sm:$0xf]
      %v1391 = vld [vmem:[%s1372 + $0x48] sm:$0xf]
      %v1392 = vld [vmem:[%s1372 + $0x4c] sm:$0xf]
      %v1393 = vld [vmem:[%s1372 + $0x50] sm:$0xf]
      %v1394 = vld [vmem:[%s1372 + $0x54] sm:$0xf]
      %v1395 = vld [vmem:[%s1372 + $0x58] sm:$0xf]
      %v1396 = vld [vmem:[%s1372 + $0x5c] sm:$0xf]
      %v1397 = vld [vmem:[%s1372 + $0x60] sm:$0xf]
      %v1398 = vld [vmem:[%s1372 + $0x64] sm:$0xf]
      %v1399 = vld [vmem:[%s1372 + $0x68] sm:$0xf]
      %v1400 = vld [vmem:[%s1372 + $0x6c] sm:$0xf]
      %v1401 = vld [vmem:[%s1372 + $0x70] sm:$0xf]
      %v1402 = vld [vmem:[%s1372 + $0x74] sm:$0xf]
      %v1403 = vld [vmem:[%s1372 + $0x78] sm:$0xf]
      %v1404 = vld [vmem:[%s1372 + $0x7c] sm:$0xf]
      %s1405 = scalar_lea.vmem [#allocation20], %s314
      %v1406 = vld [vmem:[%s1405] sm:$0x1]
      %v1408 = vperm.slane %v1406, 0
      %v1442 = vunpack.c.l.b16 %v1373
      %v1443 = vunpack.c.l.b16 %v1374
      %v1444 = vunpack.c.l.b16 %v1375
      %v1445 = vunpack.c.l.b16 %v1376
      %v1446 = vunpack.c.l.b16 %v1377
      %v1447 = vunpack.c.l.b16 %v1378
      %v1448 = vunpack.c.l.b16 %v1379
      %v1449 = vunpack.c.l.b16 %v1380
      %v1450 = vunpack.c.l.b16 %v1381
      %v1451 = vunpack.c.l.b16 %v1382
      %v1452 = vunpack.c.l.b16 %v1383
      %v1453 = vunpack.c.l.b16 %v1384
      %v1454 = vunpack.c.l.b16 %v1385
      %v1455 = vunpack.c.l.b16 %v1386
      %v1456 = vunpack.c.l.b16 %v1387
      %v1457 = vunpack.c.l.b16 %v1388
      %v1458 = vunpack.c.l.b16 %v1389
      %v1459 = vunpack.c.l.b16 %v1390
      %v1460 = vunpack.c.l.b16 %v1391
      %v1461 = vunpack.c.l.b16 %v1392
      %v1462 = vunpack.c.l.b16 %v1393
      %v1463 = vunpack.c.l.b16 %v1394
      %v1464 = vunpack.c.l.b16 %v1395
      %v1465 = vunpack.c.l.b16 %v1396
      %v1466 = vunpack.c.l.b16 %v1397
      %v1467 = vunpack.c.l.b16 %v1398
      %v1468 = vunpack.c.l.b16 %v1399
      %v1469 = vunpack.c.l.b16 %v1400
      %v1470 = vunpack.c.l.b16 %v1401
      %v1471 = vunpack.c.l.b16 %v1402
      %v1472 = vunpack.c.l.b16 %v1403
      %v1473 = vunpack.c.l.b16 %v1404
      %v1474 = vpack.c.b16 %v1443, %v1442
      %v1475 = vpack.c.b16 %v1445, %v1444
      %v1476 = vpack.c.b16 %v1447, %v1446
      %v1477 = vpack.c.b16 %v1449, %v1448
      %v1478 = vpack.c.b16 %v1451, %v1450
      %v1479 = vpack.c.b16 %v1453, %v1452
      %v1480 = vpack.c.b16 %v1455, %v1454
      %v1481 = vpack.c.b16 %v1457, %v1456
      %v1482 = vpack.c.b16 %v1459, %v1458
      %v1483 = vpack.c.b16 %v1461, %v1460
      %v1484 = vpack.c.b16 %v1463, %v1462
      %v1485 = vpack.c.b16 %v1465, %v1464
      %v1486 = vpack.c.b16 %v1467, %v1466
      %v1487 = vpack.c.b16 %v1469, %v1468
      %v1488 = vpack.c.b16 %v1471, %v1470
      %v1489 = vpack.c.b16 %v1473, %v1472
      %1506 = vmatpush.bf16.msra.mxu0 %v1481
      %1507 = vmatpush.bf16.msra.mxu0 %v1480
      %1508 = vmatpush.bf16.msra.mxu0 %v1479
      %1509 = vmatpush.bf16.msra.mxu0 %v1478
      %1510 = vmatpush.bf16.msra.mxu0 %v1477
      %1511 = vmatpush.bf16.msra.mxu0 %v1476
      %1512 = vmatpush.bf16.msra.mxu0 %v1475
      %1513 = vmatpush.bf16.msra.mxu0 %v1474
      %1514 = vmatmul.bf16.gmra.mxu0 %v1369
      %v1515 = vpop.f32.mrf.mxu0
      %v1516 = vadd.f32 %v1408, %v1515
      %v1517 = vpop.f32.mrf.mxu0
      %v1518 = vadd.f32 %v1408, %v1517
      %1519 = vdwg.mxu0
      %1520 = vmatpush.bf16.msra.mxu0 %v1489
      %1521 = vmatpush.bf16.msra.mxu0 %v1488
      %1522 = vmatpush.bf16.msra.mxu0 %v1487
      %1523 = vmatpush.bf16.msra.mxu0 %v1486
      %1524 = vmatpush.bf16.msra.mxu0 %v1485
      %1525 = vmatpush.bf16.msra.mxu0 %v1484
      %1526 = vmatpush.bf16.msra.mxu0 %v1483
      %1527 = vmatpush.bf16.msra.mxu0 %v1482
      %1528 = vmatmul.bf16.gmra.mxu0 %v1370
      %v1529 = vpop.f32.mrf.mxu0
      %v1530 = vadd.f32 %v1516, %v1529
      %v1531 = vpop.f32.mrf.mxu0
      %v1532 = vadd.f32 %v1518, %v1531
      %1533 = vdwg.mxu0
      %v1534 = vadd.f32 %v1227, %v1530
      %v1535 = vadd.f32 %v1228, %v1532
      %s1536 = scalar_lea.vmem %s13, %s314
      %v1537 = vld [vmem:[%s1536] sm:$0x1]
      %s1538 = scalar_lea.vmem [#allocation22], %s314
      %v1539 = vld [vmem:[%s1538] sm:$0x1]
      %1540 = vadd.xlane.f32.xlu0 %v1534
      %v1541 = vpop.xlane.xlu0 %1540
      %1542 = vadd.xlane.f32.xlu0 %v1535
      %v1543 = vpop.xlane.xlu0 %1542
      %v1544 = vmul.f32 %v1541, %v1182
      %v1545 = vmul.f32 %v1543, %v1182
      %v1546 = vsub.f32 %v1534, %v1544
      %v1547 = vsub.f32 %v1535, %v1545
      %v1548 = vmul.f32 %v1546, %v1546
      %v1549 = vmul.f32 %v1547, %v1547
      %1550 = vadd.xlane.f32.xlu0 %v1548
      %v1551 = vpop.xlane.xlu0 %1550
      %1552 = vadd.xlane.f32.xlu0 %v1549
      %v1553 = vpop.xlane.xlu0 %1552
      %v1554 = vmul.f32 %v1551, %v1182
      %v1555 = vmul.f32 %v1553, %v1182
      %v1556 = vadd.f32 %v1554, 1e-05
      %v1557 = vadd.f32 %v1555, 1e-05
      %v1558 = vrsqrt.pop %v1556
      %v1559 = vmul.f32 %v1558, %v1556
      %v1560 = vmul.f32 %v1559, %v1558
      %v1561 = vmul.f32 0.5, %v1560
      %v1562 = vsub.f32 1.5, %v1561
      %v1563 = vmul.f32 %v1558, %v1562
      %vm1564 = vweird.f32 %v1556
      %vm1565 = vweird.f32 %v1558
      %vm1566 = vmor %vm1564, %vm1565
      %v1567 = vsel %vm1566, %v1558, %v1563
      %v1568 = vrsqrt.pop %v1557
      %v1569 = vmul.f32 %v1568, %v1557
      %v1570 = vmul.f32 %v1569, %v1568
      %v1571 = vmul.f32 0.5, %v1570
      %v1572 = vsub.f32 1.5, %v1571
      %v1573 = vmul.f32 %v1568, %v1572
      %vm1574 = vweird.f32 %v1557
      %vm1575 = vweird.f32 %v1568
      %vm1576 = vmor %vm1574, %vm1575
      %v1577 = vsel %vm1576, %v1568, %v1573
      %v1578 = vmul.f32 %v1546, %v1567
      %v1579 = vmul.f32 %v1547, %v1577
      %v1581 = vperm.slane %v1537, 0
      %v1583 = vmul.f32 %v1578, %v1581
      %v1584 = vmul.f32 %v1579, %v1581
      %v1586 = vperm.slane %v1539, 0
      %v1588 = vadd.f32 %v1583, %v1586
      %v1589 = vadd.f32 %v1584, %v1586
    $region130: #{tpu_custom_call.1} parent=1 // loop_footer
      %s318 = sadd.s32 1, %s314
    $region131: #{tpu_custom_call.1} parent=1 // loop_footer_branch
      %313 = sbr.rel target = $region127
    $region132: #{tpu_custom_call.1} parent=1 // loop_exit
      _
    %v1590 = vpack.c.bf16 %v320, %v319
    %v1591 = vld [vmem:[#allocation23] sm:$0xf]
    %v1592 = vld [vmem:[#allocation23 + $0x4] sm:$0xf]
    %v1593 = vld [vmem:[#allocation23 + $0x8] sm:$0xf]
    %v1594 = vld [vmem:[#allocation23 + $0xc] sm:$0xf]
    %v1595 = vld [vmem:[#allocation23 + $0x10] sm:$0xf]
    %v1596 = vld [vmem:[#allocation23 + $0x14] sm:$0xf]
    %v1597 = vld [vmem:[#allocation23 + $0x18] sm:$0xf]
    %v1598 = vld [vmem:[#allocation23 + $0x1c] sm:$0xf]
    %v1599 = vld [vmem:[#allocation23 + $0x20] sm:$0xf]
    %v1600 = vld [vmem:[#allocation23 + $0x24] sm:$0xf]
    %v1601 = vld [vmem:[#allocation23 + $0x28] sm:$0xf]
    %v1602 = vld [vmem:[#allocation23 + $0x2c] sm:$0xf]
    %v1603 = vld [vmem:[#allocation23 + $0x30] sm:$0xf]
    %v1604 = vld [vmem:[#allocation23 + $0x34] sm:$0xf]
    %v1605 = vld [vmem:[#allocation23 + $0x38] sm:$0xf]
    %v1606 = vld [vmem:[#allocation23 + $0x3c] sm:$0xf]
    %v1607 = vld [vmem:[%s16] sm:$0x1]
    %v1609 = vperm.slane %v1607, 0
    %v1627 = vunpack.c.l.b16 %v1591
    %v1628 = vunpack.c.l.b16 %v1592
    %v1629 = vunpack.c.l.b16 %v1593
    %v1630 = vunpack.c.l.b16 %v1594
    %v1631 = vunpack.c.l.b16 %v1595
    %v1632 = vunpack.c.l.b16 %v1596
    %v1633 = vunpack.c.l.b16 %v1597
    %v1634 = vunpack.c.l.b16 %v1598
    %v1635 = vunpack.c.l.b16 %v1599
    %v1636 = vunpack.c.l.b16 %v1600
    %v1637 = vunpack.c.l.b16 %v1601
    %v1638 = vunpack.c.l.b16 %v1602
    %v1639 = vunpack.c.l.b16 %v1603
    %v1640 = vunpack.c.l.b16 %v1604
    %v1641 = vunpack.c.l.b16 %v1605
    %v1642 = vunpack.c.l.b16 %v1606
    %v1643 = vpack.c.b16 %v1628, %v1627
    %v1644 = vpack.c.b16 %v1630, %v1629
    %v1645 = vpack.c.b16 %v1632, %v1631
    %v1646 = vpack.c.b16 %v1634, %v1633
    %v1647 = vpack.c.b16 %v1636, %v1635
    %v1648 = vpack.c.b16 %v1638, %v1637
    %v1649 = vpack.c.b16 %v1640, %v1639
    %v1650 = vpack.c.b16 %v1642, %v1641
    %1659 = vmatpush.bf16.msra.mxu0 %v1650
    %1660 = vmatpush.bf16.msra.mxu0 %v1649
    %1661 = vmatpush.bf16.msra.mxu0 %v1648
    %1662 = vmatpush.bf16.msra.mxu0 %v1647
    %1663 = vmatpush.bf16.msra.mxu0 %v1646
    %1664 = vmatpush.bf16.msra.mxu0 %v1645
    %1665 = vmatpush.bf16.msra.mxu0 %v1644
    %1666 = vmatpush.bf16.msra.mxu0 %v1643
    %1667 = vmatmul.bf16.gmra.mxu0 %v1590
    %v1668 = vpop.f32.mrf.mxu0
    %v1669 = vadd.f32 %v1609, %v1668
    %v1670 = vpop.f32.mrf.mxu0
    %v1671 = vadd.f32 %v1609, %v1670
    %1672 = vdwg.mxu0
    %1673 = vst [vmem:[#allocation25] sm:$0xff] %v1669
    %1674 = vst [vmem:[#allocation25 + $0x8] sm:$0xff] %v1671
    // Predicated region
    $region133: #{tpu_custom_call.1} parent=1 // pred_check
      _
    $region134: #{tpu_custom_call.1} parent=1 // pred_check_branch
      %1676 = sbr.rel (0) target = $region136
    $region135: #{tpu_custom_call.1} parent=1 // pred_region
      %1678 = vsyncadd [#allocation4], 0
      %s1679 = sshll.u32 [#allocation25], 4
      %s1680 = int_to_ptr.vmem [resolvable:$true] %s1679
      %s1681 = sshll.u32 %s17, 4
      %s1682 = int_to_ptr.hbm [resolvable:$true] %s1681
      %1687 = dma.vmem_to_hbm [thread:$0]  %s1680, 256, %s1682, [#allocation4], 128, 128, 8
    $region136: #{tpu_custom_call.1} parent=1 // pred_fallthru
      _
    // Predicated region
    $region137: #{tpu_custom_call.1} parent=1 // pred_check
      _
    $region138: #{tpu_custom_call.1} parent=1 // pred_check_branch
      %1689 = sbr.rel (0) target = $region140
    $region139: #{tpu_custom_call.1} parent=1 // pred_region
      %1691 = dma.done [#allocation4], 256
    $region140: #{tpu_custom_call.1} parent=1 // pred_fallthru
      _
    %1692 = vsyncpa [#allocation3], 1
    %1693 = vsyncpa [#allocation6], 1
    %1694 = vsyncpa [#allocation9], 1
    %1695 = vsyncpa [#allocation12], 1
    %1696 = vsyncpa [#allocation15], 1
    %1697 = vsyncpa [#allocation18], 1
    %1698 = vsyncpa [#allocation21], 1
    %1699 = vsyncpa [#allocation24], 1
    %1700 = vsyncpa [#allocation4], 1

</llo_original>
